<compile_context>
chip_gen: v5e
topology: v5e:2x2
jax: 0.10.0
libtpu: 0.0.40
codegen_flags: <defaults>
</compile_context>

<pallas_src>
import functools

import jax
import jax.numpy as jnp
from jax.experimental import pallas as pl
from jax.experimental.pallas import tpu as pltpu

# Logical (PyTorch) sizes.
INPUT = 4
HIDDEN = 32
OUTPUT = 10          # stands in for len(df['title'].unique()) in the original script

# TPU-aligned sizes.
LANE = 128
SUBLANE = 8
INPUT_K = 8          # input features padded only to the 8-row sublane tile (not 128)
HIDDEN_PAD = LANE    # hidden width padded to one 128-lane vreg (MXU-friendly)

# Max rows per grid step (sweepable: 1024 / 2048 / 4096).  Larger tiles
# amortize the ~0.35us per-step overhead; 2048 keeps plenty of VMEM headroom.
TB_MAX = 2048


def mlp_kernel(x_ref, w1_ref, b1_ref, w2_ref, b2_ref, w3_ref, b3_ref, o_ref):
    # layer1 + ReLU: bf16 MXU matmul ((tb,8)x(8,128)), f32 accumulate/bias/ReLU.
    h1 = jnp.dot(x_ref[...], w1_ref[...], preferred_element_type=jnp.float32)
    h1 = jnp.maximum(h1 + b1_ref[...], 0.0)
    # dropout1: identity in eval mode
    # TODO(synk): training-mode dropout (p=0.5) would need pltpu.prng_seed /
    # prng_random_bits with the seed mixed with pl.program_id(0) and a layer id.

    # layer2 + ReLU: (tb,128)x(128,128)
    h2 = jnp.dot(h1.astype(jnp.bfloat16), w2_ref[...], preferred_element_type=jnp.float32)
    h2 = jnp.maximum(h2 + b2_ref[...], 0.0)
    # dropout2: identity in eval mode

    # layer3 logits: (tb,128)x(128,10); narrow bf16 store (contiguous HBM DMA).
    out = jnp.dot(h2.astype(jnp.bfloat16), w3_ref[...], preferred_element_type=jnp.float32)
    o_ref[...] = (out + b3_ref[...]).astype(o_ref.dtype)


def init_linear(key, fan_in, fan_out):
    # Mimic PyTorch nn.Linear default init: U(-1/sqrt(fan_in), 1/sqrt(fan_in)).
    kw, kb = jax.random.split(key)
    bound = 1.0 / jnp.sqrt(fan_in)
    # Stored pre-transposed: (fan_in, fan_out) so the kernel computes x @ W + b.
    w = jax.random.uniform(kw, (fan_in, fan_out), jnp.float32, -bound, bound)
    b = jax.random.uniform(kb, (1, fan_out), jnp.float32, -bound, bound)
    return w, b


def init_params(key):
    k1, k2, k3 = jax.random.split(key, 3)
    w1, b1 = init_linear(k1, INPUT, HIDDEN)
    w2, b2 = init_linear(k2, HIDDEN, HIDDEN)
    w3, b3 = init_linear(k3, HIDDEN, OUTPUT)
    return (w1, b1, w2, b2, w3, b3)


def pad_params(params):
    """Zero-pad logical f32 params to TPU-aligned shapes; weights cast to bf16.

    Only the hidden width is padded to 128; the input contraction dim is padded
    to 8 and the output (logit) dim stays at its real width of 10.
    """
    w1, b1, w2, b2, w3, b3 = params

    def pad_w(w, rows, cols):
        return (jnp.zeros((rows, cols), jnp.bfloat16)
                .at[:w.shape[0], :w.shape[1]].set(w.astype(jnp.bfloat16)))

    def pad_b(b, cols):
        return jnp.zeros((1, cols), jnp.float32).at[:, :b.shape[1]].set(b)

    return (pad_w(w1, INPUT_K, HIDDEN_PAD), pad_b(b1, HIDDEN_PAD),
            pad_w(w2, HIDDEN_PAD, HIDDEN_PAD), pad_b(b2, HIDDEN_PAD),
            pad_w(w3, HIDDEN_PAD, OUTPUT), b3.astype(jnp.float32))


def choose_tb(batch, tb_max=TB_MAX):
    """Pick a batch tile: >=2 grid tiles when possible (both v7x TCs), rows a
    multiple of the 8-row sublane tile, capped at tb_max."""
    tb = min(tb_max, max(SUBLANE, (batch + 1) // 2))
    return ((tb + SUBLANE - 1) // SUBLANE) * SUBLANE


@functools.partial(jax.jit, static_argnames=("tb",))
def mlp_forward(x, padded_params, tb):
    w1p, b1p, w2p, b2p, w3p, b3p = padded_params
    batch = x.shape[0]
    num_tiles = (batch + tb - 1) // tb
    padded_batch = num_tiles * tb

    # Pad batch rows (to a tile multiple) and input features 4 -> 8 bf16 lanes.
    xp = (jnp.zeros((padded_batch, INPUT_K), jnp.bfloat16)
          .at[:batch, :INPUT].set(x.astype(jnp.bfloat16)))

    out = pl.pallas_call(
        mlp_kernel,
        # Narrow bf16 logits: 20 B/row of HBM writes instead of 512 B/row.
        out_shape=jax.ShapeDtypeStruct((padded_batch, OUTPUT), jnp.bfloat16),
        grid_spec=pltpu.PrefetchScalarGridSpec(
            num_scalar_prefetch=0,
            grid=(num_tiles,),
            in_specs=[
                # Activations: tiled over the batch, only 8 real lanes wide.
                pl.BlockSpec((tb, INPUT_K), lambda i: (i, 0)),
                # Weights / biases: constant index_maps -> VMEM-resident across steps.
                pl.BlockSpec((INPUT_K, HIDDEN_PAD), lambda i: (0, 0)),
                pl.BlockSpec((1, HIDDEN_PAD), lambda i: (0, 0)),
                pl.BlockSpec((HIDDEN_PAD, HIDDEN_PAD), lambda i: (0, 0)),
                pl.BlockSpec((1, HIDDEN_PAD), lambda i: (0, 0)),
                pl.BlockSpec((HIDDEN_PAD, OUTPUT), lambda i: (0, 0)),
                pl.BlockSpec((1, OUTPUT), lambda i: (0, 0)),
            ],
            out_specs=pl.BlockSpec((tb, OUTPUT), lambda i: (i, 0)),
        ),
        compiler_params=pltpu.CompilerParams(
            dimension_semantics=("parallel",)),  # megacore / multi-TC batch sharding
    )(xp, w1p, b1p, w2p, b2p, w3p, b3p)

    # Only batch padding remains to slice off; logits are already narrow.
    return out[:batch, :]


def reference_forward(x, params):
    # Pure-JAX reference mimicking the kernel's bf16-input / f32-accumulate math.
    w1, b1, w2, b2, w3, b3 = params

    def mm(a, w):
        return jnp.dot(a.astype(jnp.bfloat16), w.astype(jnp.bfloat16),
                       preferred_element_type=jnp.float32)

    h1 = jnp.maximum(mm(x, w1) + b1, 0.0)
    h2 = jnp.maximum(mm(h1, w2) + b2, 0.0)
    return mm(h2, w3) + b3


if __name__ == "__main__":
    key = jax.random.PRNGKey(0)
    kx, kp = jax.random.split(key)

    # Demo batch sized so the grid has 2 tiles (both v7x TensorCores active)
    # while staying tiny memory-wise (~8 KiB of real input).
    batch = 1024
    x = jax.random.normal(kx, (batch, INPUT), jnp.float32)

    params = init_params(kp)            # logical f32 params (reference)
    padded_params = pad_params(params)  # TPU-padded bf16 weights / f32 biases

    tb = choose_tb(batch)               # 512 rows -> 2 grid tiles
    out = mlp_forward(x, padded_params, tb=tb)
    out = jax.block_until_ready(out)

    ref = reference_forward(x, params)
    assert out.shape == (batch, OUTPUT)
    assert jnp.allclose(out.astype(jnp.float32), ref, atol=2e-2, rtol=2e-2), \
        "mismatch vs pure-JAX reference"

    print("KERNEL_OK")
</pallas_src>

<mosaic_0001>
module attributes {stable_mosaic.version = 11 : i64} {
  func.func @mlp_kernel(%arg0: i32, %arg1: memref<512x8xbf16, #tpu.memory_space<vmem>>, %arg2: memref<8x128xbf16, #tpu.memory_space<vmem>>, %arg3: memref<1x128xf32, #tpu.memory_space<vmem>>, %arg4: memref<128x128xbf16, #tpu.memory_space<vmem>>, %arg5: memref<1x128xf32, #tpu.memory_space<vmem>>, %arg6: memref<128x10xbf16, #tpu.memory_space<vmem>>, %arg7: memref<1x10xf32, #tpu.memory_space<vmem>>, %arg8: memref<512x10xbf16, #tpu.memory_space<vmem>>) attributes {dimension_semantics = [#tpu.dimension_semantics<parallel>], iteration_bounds = array<i64: 2>, scalar_prefetch = 0 : i64, scratch_operands = 0 : i64, tpu.core_type = #tpu.core_type<tc>, window_params = [{transform_indices = @transform_0, window_bounds = array<i64: 512, 8>}, {pipeline_mode = #tpu.pipeline_mode<synchronous>, transform_indices = @transform_1, window_bounds = array<i64: 8, 128>}, {pipeline_mode = #tpu.pipeline_mode<synchronous>, transform_indices = @transform_2, window_bounds = array<i64: 1, 128>}, {pipeline_mode = #tpu.pipeline_mode<synchronous>, transform_indices = @transform_3, window_bounds = array<i64: 128, 128>}, {pipeline_mode = #tpu.pipeline_mode<synchronous>, transform_indices = @transform_4, window_bounds = array<i64: 1, 128>}, {pipeline_mode = #tpu.pipeline_mode<synchronous>, transform_indices = @transform_5, window_bounds = array<i64: 128, 10>}, {pipeline_mode = #tpu.pipeline_mode<synchronous>, transform_indices = @transform_6, window_bounds = array<i64: 1, 10>}, {transform_indices = @transform_7, window_bounds = array<i64: 512, 10>}]} {
    %c0 = arith.constant 0 : index
    %c0_0 = arith.constant 0 : index
    %0 = vector.load %arg1[%c0, %c0_0] : memref<512x8xbf16, #tpu.memory_space<vmem>>, vector<512x8xbf16>
    %c0_1 = arith.constant 0 : index
    %c0_2 = arith.constant 0 : index
    %1 = vector.load %arg2[%c0_1, %c0_2] : memref<8x128xbf16, #tpu.memory_space<vmem>>, vector<8x128xbf16>
    %cst = arith.constant dense<0.000000e+00> : vector<512x128xf32>
    %2 = tpu.matmul %0, %1, %cst {dimension_numbers = #tpu.dot_dimension_numbers<[1], [0], [0], [1], [0, 0, 1, 1], [], []>} : vector<512x8xbf16>, vector<8x128xbf16>, vector<512x128xf32> -> vector<512x128xf32>
    %c0_3 = arith.constant 0 : index
    %c0_4 = arith.constant 0 : index
    %3 = vector.load %arg3[%c0_3, %c0_4] : memref<1x128xf32, #tpu.memory_space<vmem>>, vector<1x128xf32>
    %4 = vector.broadcast %3 : vector<1x128xf32> to vector<512x128xf32>
    %5 = arith.addf %2, %4 : vector<512x128xf32>
    %cst_5 = arith.constant 0.000000e+00 : f32
    %6 = vector.broadcast %cst_5 : f32 to vector<512x128xf32>
    %7 = arith.maximumf %5, %6 : vector<512x128xf32>
    %8 = arith.truncf %7 : vector<512x128xf32> to vector<512x128xbf16>
    %c0_6 = arith.constant 0 : index
    %c0_7 = arith.constant 0 : index
    %9 = vector.load %arg4[%c0_6, %c0_7] : memref<128x128xbf16, #tpu.memory_space<vmem>>, vector<128x128xbf16>
    %cst_8 = arith.constant dense<0.000000e+00> : vector<512x128xf32>
    %10 = tpu.matmul %8, %9, %cst_8 {dimension_numbers = #tpu.dot_dimension_numbers<[1], [0], [0], [1], [0, 0, 1, 1], [], []>} : vector<512x128xbf16>, vector<128x128xbf16>, vector<512x128xf32> -> vector<512x128xf32>
    %c0_9 = arith.constant 0 : index
    %c0_10 = arith.constant 0 : index
    %11 = vector.load %arg5[%c0_9, %c0_10] : memref<1x128xf32, #tpu.memory_space<vmem>>, vector<1x128xf32>
    %12 = vector.broadcast %11 : vector<1x128xf32> to vector<512x128xf32>
    %13 = arith.addf %10, %12 : vector<512x128xf32>
    %cst_11 = arith.constant 0.000000e+00 : f32
    %14 = vector.broadcast %cst_11 : f32 to vector<512x128xf32>
    %15 = arith.maximumf %13, %14 : vector<512x128xf32>
    %16 = arith.truncf %15 : vector<512x128xf32> to vector<512x128xbf16>
    %c0_12 = arith.constant 0 : index
    %c0_13 = arith.constant 0 : index
    %17 = vector.load %arg6[%c0_12, %c0_13] : memref<128x10xbf16, #tpu.memory_space<vmem>>, vector<128x10xbf16>
    %cst_14 = arith.constant dense<0.000000e+00> : vector<512x10xf32>
    %18 = tpu.matmul %16, %17, %cst_14 {dimension_numbers = #tpu.dot_dimension_numbers<[1], [0], [0], [1], [0, 0, 1, 1], [], []>} : vector<512x128xbf16>, vector<128x10xbf16>, vector<512x10xf32> -> vector<512x10xf32>
    %c0_15 = arith.constant 0 : index
    %c0_16 = arith.constant 0 : index
    %19 = vector.load %arg7[%c0_15, %c0_16] : memref<1x10xf32, #tpu.memory_space<vmem>>, vector<1x10xf32>
    %20 = vector.broadcast %19 : vector<1x10xf32> to vector<512x10xf32>
    %21 = arith.addf %18, %20 : vector<512x10xf32>
    %22 = arith.truncf %21 : vector<512x10xf32> to vector<512x10xbf16>
    %c0_17 = arith.constant 0 : index
    %c0_18 = arith.constant 0 : index
    %23 = vector.load %arg8[%c0_17, %c0_18] : memref<512x10xbf16, #tpu.memory_space<vmem>>, vector<512x10xbf16>
    tpu.vector_store %arg8[%c0_17, %c0_18], %22 {strides = array<i32>} : memref<512x10xbf16, #tpu.memory_space<vmem>>, vector<512x10xbf16>,
    return
  }
  func.func @transform_0(%arg0: i32) -> (i32, i32) {
    %c0_i32 = arith.constant 0 : i32
    %c0_i32_0 = arith.constant 0 : i32
    return %arg0, %c0_i32 : i32, i32
  }
  func.func @transform_1(%arg0: i32) -> (i32, i32) {
    %c0_i32 = arith.constant 0 : i32
    %c0_i32_0 = arith.constant 0 : i32
    %c0_i32_1 = arith.constant 0 : i32
    return %c0_i32, %c0_i32_0 : i32, i32
  }
  func.func @transform_2(%arg0: i32) -> (i32, i32) {
    %c0_i32 = arith.constant 0 : i32
    %c0_i32_0 = arith.constant 0 : i32
    %c0_i32_1 = arith.constant 0 : i32
    return %c0_i32, %c0_i32_0 : i32, i32
  }
  func.func @transform_3(%arg0: i32) -> (i32, i32) {
    %c0_i32 = arith.constant 0 : i32
    %c0_i32_0 = arith.constant 0 : i32
    %c0_i32_1 = arith.constant 0 : i32
    return %c0_i32, %c0_i32_0 : i32, i32
  }
  func.func @transform_4(%arg0: i32) -> (i32, i32) {
    %c0_i32 = arith.constant 0 : i32
    %c0_i32_0 = arith.constant 0 : i32
    %c0_i32_1 = arith.constant 0 : i32
    return %c0_i32, %c0_i32_0 : i32, i32
  }
  func.func @transform_5(%arg0: i32) -> (i32, i32) {
    %c0_i32 = arith.constant 0 : i32
    %c0_i32_0 = arith.constant 0 : i32
    %c0_i32_1 = arith.constant 0 : i32
    return %c0_i32, %c0_i32_0 : i32, i32
  }
  func.func @transform_6(%arg0: i32) -> (i32, i32) {
    %c0_i32 = arith.constant 0 : i32
    %c0_i32_0 = arith.constant 0 : i32
    %c0_i32_1 = arith.constant 0 : i32
    return %c0_i32, %c0_i32_0 : i32, i32
  }
  func.func @transform_7(%arg0: i32) -> (i32, i32) {
    %c0_i32 = arith.constant 0 : i32
    %c0_i32_0 = arith.constant 0 : i32
    return %arg0, %c0_i32 : i32, i32
  }
}

</mosaic_0001>

<llo_original>
// kernel: mlp_forward.1
$region0: #{mlp_forward.1}
  #allocation0 [shape = 'u32[]', space=smem, size = 0x4, offset = 0x4, fixed_abs, tag = 'smem constant byte address 0x4 - core index']
  #allocation1 [shape = 'u32[72,128]{1,0:T(1,128)}', space=vmem, size = 0x9000, scoped, tag = 'internal scratch']
  %s0 = inlined_call_operand.vmem [shape: bf16[1024,8], index: 0, kind: input, shape index: {}]
  %s1 = inlined_call_operand.vmem [shape: bf16[8,128], index: 1, kind: input, shape index: {}]
  %s2 = inlined_call_operand.vmem [shape: f32[1,128], index: 2, kind: input, shape index: {}]
  %s3 = inlined_call_operand.vmem [shape: bf16[128,128], index: 3, kind: input, shape index: {}]
  %s4 = inlined_call_operand.vmem [shape: f32[1,128], index: 4, kind: input, shape index: {}]
  %s5 = inlined_call_operand.vmem [shape: bf16[128,10], index: 5, kind: input, shape index: {}]
  %s6 = inlined_call_operand.vmem [shape: f32[1,10], index: 6, kind: input, shape index: {}]
  %s7 = inlined_call_operand.vmem [shape: bf16[1024,10], index: 7, kind: output, shape index: {}]
  %s8 = sld [smem:[#allocation0]]
  $region61: #{mlp_forward.1} parent=0
    _
  %s10 = ssub.s32 1, %s8
  %s11 = scalar_select 0, %s10, %s8
  loop: start=0, step=1, limit=4
  $region2: #{mlp_forward.1} parent=0 // loop_pre_header
    _
  $region3: #{mlp_forward.1} parent=0 // loop_header
    %s13 = sphi 0, %s17
    %p14 = scmp.ge.s32.totalorder %s13, 4
    %s23 = sphi 0, %s25
    %s26 = sphi 0, %s23
    %s27 = sphi 0, %s26
    %s43 = sphi 0, %s27
    %s47 = sphi 0, %s47
    %s49 = sphi 0, %s47
    %s50 = sphi 0, %s49
    %s64 = sphi 0, %s50
    %s68 = sphi 0, %s68
    %s70 = sphi 0, %s68
    %s71 = sphi 0, %s70
    %s85 = sphi 0, %s71
    %s89 = sphi 0, %s89
    %s91 = sphi 0, %s89
    %s92 = sphi 0, %s91
    %s106 = sphi 0, %s92
    %s110 = sphi 0, %s110
    %s112 = sphi 0, %s110
    %s113 = sphi 0, %s112
    %s127 = sphi 0, %s113
    %s131 = sphi 0, %s131
    %s133 = sphi 0, %s131
    %s134 = sphi 0, %s133
    %s148 = sphi 0, %s134
    %s152 = sphi 0, %s152
    %s154 = sphi 0, %s152
    %s155 = sphi 0, %s154
    %s169 = sphi 0, %s155
    %s175 = sphi 0, %s177
    %s178 = sphi 0, %s175
    %s179 = sphi 0, %s178
    %s195 = sphi 0, %s179
  $region4: #{mlp_forward.1} parent=0 // loop_header_branch
    %16 = sbr.rel (%p14) target = $region8
  $region5: #{mlp_forward.1} parent=0 // loop_body
    %s18 = ssub.s32 %s13, 1
    %s19 = ssub.s32 %s13, 2
    %s20 = sadd.s32 %s13, 1
    %s21 = ssub.s32 %s13, %s20
    %p22 = scmp.eq.s32.totalorder %s21, 0
    %s24 = sadd.s32 %s23, 1
    %s25 = scalar_select %p22, %s23, %s24
    %p28 = pneg %p22
    %p29 = scmp.eq.s32.totalorder %s13, 1
    %p30 = por %p28, %p29
    %p31 = scmp.ne.s32.totalorder %s23, %s26
    %p32 = scmp.eq.s32.totalorder %s13, 0
    %p33 = por %p31, %p32
    %p34 = scmp.ne.s32.totalorder %s23, %s26
    %p35 = scmp.eq.s32.totalorder %s18, 1
    %p36 = por %p34, %p35
    %p37 = scmp.ne.s32.totalorder %s26, %s27
    %p38 = scmp.eq.s32.totalorder %s18, 0
    %p39 = por %p37, %p38
    %p40 = scmp.ne.s32.totalorder %s26, %s27
    %p41 = scmp.eq.s32.totalorder %s19, 1
    %p42 = por %p40, %p41
    %p44 = scmp.ne.s32.totalorder %s27, %s43
    %p45 = scmp.eq.s32.totalorder %s19, 0
    %p46 = por %p44, %p45
    %s48 = sadd.s32 %s47, 1
    %p51 = scmp.eq.s32.totalorder %s13, 1
    %p52 = scmp.ne.s32.totalorder %s47, %s49
    %p53 = scmp.eq.s32.totalorder %s13, 0
    %p54 = por %p52, %p53
    %p55 = scmp.ne.s32.totalorder %s47, %s49
    %p56 = scmp.eq.s32.totalorder %s18, 1
    %p57 = por %p55, %p56
    %p58 = scmp.ne.s32.totalorder %s49, %s50
    %p59 = scmp.eq.s32.totalorder %s18, 0
    %p60 = por %p58, %p59
    %p61 = scmp.ne.s32.totalorder %s49, %s50
    %p62 = scmp.eq.s32.totalorder %s19, 1
    %p63 = por %p61, %p62
    %p65 = scmp.ne.s32.totalorder %s50, %s64
    %p66 = scmp.eq.s32.totalorder %s19, 0
    %p67 = por %p65, %p66
    %s69 = sadd.s32 %s68, 1
    %p72 = scmp.eq.s32.totalorder %s13, 1
    %p73 = scmp.ne.s32.totalorder %s68, %s70
    %p74 = scmp.eq.s32.totalorder %s13, 0
    %p75 = por %p73, %p74
    %p76 = scmp.ne.s32.totalorder %s68, %s70
    %p77 = scmp.eq.s32.totalorder %s18, 1
    %p78 = por %p76, %p77
    %p79 = scmp.ne.s32.totalorder %s70, %s71
    %p80 = scmp.eq.s32.totalorder %s18, 0
    %p81 = por %p79, %p80
    %p82 = scmp.ne.s32.totalorder %s70, %s71
    %p83 = scmp.eq.s32.totalorder %s19, 1
    %p84 = por %p82, %p83
    %p86 = scmp.ne.s32.totalorder %s71, %s85
    %p87 = scmp.eq.s32.totalorder %s19, 0
    %p88 = por %p86, %p87
    %s90 = sadd.s32 %s89, 1
    %p93 = scmp.eq.s32.totalorder %s13, 1
    %p94 = scmp.ne.s32.totalorder %s89, %s91
    %p95 = scmp.eq.s32.totalorder %s13, 0
    %p96 = por %p94, %p95
    %p97 = scmp.ne.s32.totalorder %s89, %s91
    %p98 = scmp.eq.s32.totalorder %s18, 1
    %p99 = por %p97, %p98
    %p100 = scmp.ne.s32.totalorder %s91, %s92
    %p101 = scmp.eq.s32.totalorder %s18, 0
    %p102 = por %p100, %p101
    %p103 = scmp.ne.s32.totalorder %s91, %s92
    %p104 = scmp.eq.s32.totalorder %s19, 1
    %p105 = por %p103, %p104
    %p107 = scmp.ne.s32.totalorder %s92, %s106
    %p108 = scmp.eq.s32.totalorder %s19, 0
    %p109 = por %p107, %p108
    %s111 = sadd.s32 %s110, 1
    %p114 = scmp.eq.s32.totalorder %s13, 1
    %p115 = scmp.ne.s32.totalorder %s110, %s112
    %p116 = scmp.eq.s32.totalorder %s13, 0
    %p117 = por %p115, %p116
    %p118 = scmp.ne.s32.totalorder %s110, %s112
    %p119 = scmp.eq.s32.totalorder %s18, 1
    %p120 = por %p118, %p119
    %p121 = scmp.ne.s32.totalorder %s112, %s113
    %p122 = scmp.eq.s32.totalorder %s18, 0
    %p123 = por %p121, %p122
    %p124 = scmp.ne.s32.totalorder %s112, %s113
    %p125 = scmp.eq.s32.totalorder %s19, 1
    %p126 = por %p124, %p125
    %p128 = scmp.ne.s32.totalorder %s113, %s127
    %p129 = scmp.eq.s32.totalorder %s19, 0
    %p130 = por %p128, %p129
    %s132 = sadd.s32 %s131, 1
    %p135 = scmp.eq.s32.totalorder %s13, 1
    %p136 = scmp.ne.s32.totalorder %s131, %s133
    %p137 = scmp.eq.s32.totalorder %s13, 0
    %p138 = por %p136, %p137
    %p139 = scmp.ne.s32.totalorder %s131, %s133
    %p140 = scmp.eq.s32.totalorder %s18, 1
    %p141 = por %p139, %p140
    %p142 = scmp.ne.s32.totalorder %s133, %s134
    %p143 = scmp.eq.s32.totalorder %s18, 0
    %p144 = por %p142, %p143
    %p145 = scmp.ne.s32.totalorder %s133, %s134
    %p146 = scmp.eq.s32.totalorder %s19, 1
    %p147 = por %p145, %p146
    %p149 = scmp.ne.s32.totalorder %s134, %s148
    %p150 = scmp.eq.s32.totalorder %s19, 0
    %p151 = por %p149, %p150
    %s153 = sadd.s32 %s152, 1
    %p156 = scmp.eq.s32.totalorder %s13, 1
    %p157 = scmp.ne.s32.totalorder %s152, %s154
    %p158 = scmp.eq.s32.totalorder %s13, 0
    %p159 = por %p157, %p158
    %p160 = scmp.ne.s32.totalorder %s152, %s154
    %p161 = scmp.eq.s32.totalorder %s18, 1
    %p162 = por %p160, %p161
    %p163 = scmp.ne.s32.totalorder %s154, %s155
    %p164 = scmp.eq.s32.totalorder %s18, 0
    %p165 = por %p163, %p164
    %p166 = scmp.ne.s32.totalorder %s154, %s155
    %p167 = scmp.eq.s32.totalorder %s19, 1
    %p168 = por %p166, %p167
    %p170 = scmp.ne.s32.totalorder %s155, %s169
    %p171 = scmp.eq.s32.totalorder %s19, 0
    %p172 = por %p170, %p171
    %s173 = ssub.s32 %s13, %s20
    %p174 = scmp.eq.s32.totalorder %s173, 0
    %s176 = sadd.s32 %s175, 1
    %s177 = scalar_select %p174, %s175, %s176
    %p180 = pneg %p174
    %p181 = scmp.eq.s32.totalorder %s13, 1
    %p182 = por %p180, %p181
    %p183 = scmp.ne.s32.totalorder %s175, %s178
    %p184 = scmp.eq.s32.totalorder %s13, 0
    %p185 = por %p183, %p184
    %p186 = scmp.ne.s32.totalorder %s175, %s178
    %p187 = scmp.eq.s32.totalorder %s18, 1
    %p188 = por %p186, %p187
    %p189 = scmp.ne.s32.totalorder %s178, %s179
    %p190 = scmp.eq.s32.totalorder %s18, 0
    %p191 = por %p189, %p190
    %p192 = scmp.ne.s32.totalorder %s178, %s179
    %p193 = scmp.eq.s32.totalorder %s19, 1
    %p194 = por %p192, %p193
    %p196 = scmp.ne.s32.totalorder %s179, %s195
    %p197 = scmp.eq.s32.totalorder %s19, 0
    %p198 = por %p196, %p197
    %p199 = scmp.le.s32.totalorder 1, %s13
    %p200 = scmp.lt.s32.totalorder %s13, 3
    %p201 = pnand %p199, %p200
    %p202 = pneg %p201
    // Predicated region
    $region9: #{mlp_forward.1} parent=5 // pred_check
      _
    $region10: #{mlp_forward.1} parent=5 // pred_check_branch
      %204 = sbr.rel (%p201) target = $region12
    $region11: #{mlp_forward.1} parent=5 // pred_region
      %s205 = ssub.s32 %s13, 1
      // Predicated region
      $region13: #{mlp_forward.1} parent=11 // pred_check
        %p206 = pneg %p60
      $region14: #{mlp_forward.1} parent=11 // pred_check_branch
        %208 = sbr.rel (%p206) target = $region16
      $region15: #{mlp_forward.1} parent=11 // pred_region
        _
      $region16: #{mlp_forward.1} parent=11 // pred_fallthru
        _
      // Predicated region
      $region17: #{mlp_forward.1} parent=11 // pred_check
        %p209 = pneg %p81
      $region18: #{mlp_forward.1} parent=11 // pred_check_branch
        %211 = sbr.rel (%p209) target = $region20
      $region19: #{mlp_forward.1} parent=11 // pred_region
        _
      $region20: #{mlp_forward.1} parent=11 // pred_fallthru
        _
      // Predicated region
      $region21: #{mlp_forward.1} parent=11 // pred_check
        %p212 = pneg %p102
      $region22: #{mlp_forward.1} parent=11 // pred_check_branch
        %214 = sbr.rel (%p212) target = $region24
      $region23: #{mlp_forward.1} parent=11 // pred_region
        _
      $region24: #{mlp_forward.1} parent=11 // pred_fallthru
        _
      // Predicated region
      $region25: #{mlp_forward.1} parent=11 // pred_check
        %p215 = pneg %p123
      $region26: #{mlp_forward.1} parent=11 // pred_check_branch
        %217 = sbr.rel (%p215) target = $region28
      $region27: #{mlp_forward.1} parent=11 // pred_region
        _
      $region28: #{mlp_forward.1} parent=11 // pred_fallthru
        _
      // Predicated region
      $region29: #{mlp_forward.1} parent=11 // pred_check
        %p218 = pneg %p144
      $region30: #{mlp_forward.1} parent=11 // pred_check_branch
        %220 = sbr.rel (%p218) target = $region32
      $region31: #{mlp_forward.1} parent=11 // pred_region
        _
      $region32: #{mlp_forward.1} parent=11 // pred_fallthru
        _
      // Predicated region
      $region33: #{mlp_forward.1} parent=11 // pred_check
        %p221 = pneg %p165
      $region34: #{mlp_forward.1} parent=11 // pred_check_branch
        %223 = sbr.rel (%p221) target = $region36
      $region35: #{mlp_forward.1} parent=11 // pred_region
        _
      $region36: #{mlp_forward.1} parent=11 // pred_fallthru
        _
    $region12: #{mlp_forward.1} parent=5 // pred_fallthru
      _
    %p224 = scmp.lt.s32.totalorder %s13, 2
    // Predicated region
    $region37: #{mlp_forward.1} parent=5 // pred_check
      %p225 = pneg %p224
    $region38: #{mlp_forward.1} parent=5 // pred_check_branch
      %227 = sbr.rel (%p225) target = $region40
    $region39: #{mlp_forward.1} parent=5 // pred_region
      // Predicated region
      $region41: #{mlp_forward.1} parent=39 // pred_check
        %p228 = pneg %p33
      $region42: #{mlp_forward.1} parent=39 // pred_check_branch
        %230 = sbr.rel (%p228) target = $region44
      $region43: #{mlp_forward.1} parent=39 // pred_region
        %s231 = smul.u32 64, %s13
        %p232 = scmp.lt.s32.totalorder %s231, 127
        %s233 = scalar_select %p232, %s231, 127
        %s234 = smul.addr %s233, 4
        %s235 = scalar_lea.vmem %s0, %s234
        %s236 = smul.u32 64, %s13
      $region44: #{mlp_forward.1} parent=39 // pred_fallthru
        _
    $region40: #{mlp_forward.1} parent=5 // pred_fallthru
      _
    %p237 = scmp.le.s32.totalorder 1, %s13
    %p238 = scmp.lt.s32.totalorder %s13, 3
    %p239 = pnand %p237, %p238
    %p240 = pneg %p239
    // Predicated region
    $region45: #{mlp_forward.1} parent=5 // pred_check
      _
    $region46: #{mlp_forward.1} parent=5 // pred_check_branch
      %242 = sbr.rel (%p239) target = $region48
    $region47: #{mlp_forward.1} parent=5 // pred_region
      %s243 = ssub.s32 %s13, 1
      %s244 = smul.u32 64, %s18
      %p245 = scmp.lt.s32.totalorder %s244, 127
      %s246 = scalar_select %p245, %s244, 127
      %s247 = smul.addr %s246, 4
      %s248 = scalar_lea.vmem %s0, %s247
      %p249 = pneg %p39
      %p250 = pneg %p36
      %p251 = pneg %p60
      %p252 = pneg %p57
      %p253 = pneg %p81
      %p254 = pneg %p78
      %p255 = pneg %p102
      %p256 = pneg %p99
      %p257 = pneg %p123
      %p258 = pneg %p120
      %p259 = pneg %p144
      %p260 = pneg %p141
      %p261 = pneg %p165
      %p262 = pneg %p162
      %p263 = pneg %p191
      %p264 = pneg %p188
      %s265 = smul.u32 64, %s18
      %p266 = scmp.lt.s32.totalorder %s265, 127
      %s267 = scalar_select %p266, %s265, 127
      %s268 = smul.addr %s267, 4
      %s269 = scalar_lea.vmem %s7, %s268
      %s270 = smul.u32 64, %s18
      %p271 = scmp.lt.s32.totalorder %s270, 127
      %s272 = scalar_select %p271, %s270, 127
      %s273 = smul.addr %s272, 4
      %s274 = scalar_lea.vmem %s0, %s273
      %s275 = smul.u32 64, %s18
      %s276 = smul.u32 64, %s18
      %p277 = scmp.lt.s32.totalorder %s276, 127
      %s278 = scalar_select %p277, %s276, 127
      %s279 = smul.addr %s278, 4
      %s280 = scalar_lea.vmem %s7, %s279
      %s281 = smul.u32 64, %s18
      %v283 = vld [vmem:[%s274] sm:$0xf]
      %v284 = vld [vmem:[%s274 + $0x4] sm:$0xf]
      %v285 = vld [vmem:[%s274 + $0x8] sm:$0xf]
      %v286 = vld [vmem:[%s274 + $0xc] sm:$0xf]
      %v287 = vld [vmem:[%s274 + $0x10] sm:$0xf]
      %v288 = vld [vmem:[%s274 + $0x14] sm:$0xf]
      %v289 = vld [vmem:[%s274 + $0x18] sm:$0xf]
      %v290 = vld [vmem:[%s274 + $0x1c] sm:$0xf]
      %v291 = vld [vmem:[%s274 + $0x20] sm:$0xf]
      %v292 = vld [vmem:[%s274 + $0x24] sm:$0xf]
      %v293 = vld [vmem:[%s274 + $0x28] sm:$0xf]
      %v294 = vld [vmem:[%s274 + $0x2c] sm:$0xf]
      %v295 = vld [vmem:[%s274 + $0x30] sm:$0xf]
      %v296 = vld [vmem:[%s274 + $0x34] sm:$0xf]
      %v297 = vld [vmem:[%s274 + $0x38] sm:$0xf]
      %v298 = vld [vmem:[%s274 + $0x3c] sm:$0xf]
      %v299 = vld [vmem:[%s274 + $0x40] sm:$0xf]
      %v300 = vld [vmem:[%s274 + $0x44] sm:$0xf]
      %v301 = vld [vmem:[%s274 + $0x48] sm:$0xf]
      %v302 = vld [vmem:[%s274 + $0x4c] sm:$0xf]
      %v303 = vld [vmem:[%s274 + $0x50] sm:$0xf]
      %v304 = vld [vmem:[%s274 + $0x54] sm:$0xf]
      %v305 = vld [vmem:[%s274 + $0x58] sm:$0xf]
      %v306 = vld [vmem:[%s274 + $0x5c] sm:$0xf]
      %v307 = vld [vmem:[%s274 + $0x60] sm:$0xf]
      %v308 = vld [vmem:[%s274 + $0x64] sm:$0xf]
      %v309 = vld [vmem:[%s274 + $0x68] sm:$0xf]
      %v310 = vld [vmem:[%s274 + $0x6c] sm:$0xf]
      %v311 = vld [vmem:[%s274 + $0x70] sm:$0xf]
      %v312 = vld [vmem:[%s274 + $0x74] sm:$0xf]
      %v313 = vld [vmem:[%s274 + $0x78] sm:$0xf]
      %v314 = vld [vmem:[%s274 + $0x7c] sm:$0xf]
      %v315 = vld [vmem:[%s274 + $0x80] sm:$0xf]
      %v316 = vld [vmem:[%s274 + $0x84] sm:$0xf]
      %v317 = vld [vmem:[%s274 + $0x88] sm:$0xf]
      %v318 = vld [vmem:[%s274 + $0x8c] sm:$0xf]
      %v319 = vld [vmem:[%s274 + $0x90] sm:$0xf]
      %v320 = vld [vmem:[%s274 + $0x94] sm:$0xf]
      %v321 = vld [vmem:[%s274 + $0x98] sm:$0xf]
      %v322 = vld [vmem:[%s274 + $0x9c] sm:$0xf]
      %v323 = vld [vmem:[%s274 + $0xa0] sm:$0xf]
      %v324 = vld [vmem:[%s274 + $0xa4] sm:$0xf]
      %v325 = vld [vmem:[%s274 + $0xa8] sm:$0xf]
      %v326 = vld [vmem:[%s274 + $0xac] sm:$0xf]
      %v327 = vld [vmem:[%s274 + $0xb0] sm:$0xf]
      %v328 = vld [vmem:[%s274 + $0xb4] sm:$0xf]
      %v329 = vld [vmem:[%s274 + $0xb8] sm:$0xf]
      %v330 = vld [vmem:[%s274 + $0xbc] sm:$0xf]
      %v331 = vld [vmem:[%s274 + $0xc0] sm:$0xf]
      %v332 = vld [vmem:[%s274 + $0xc4] sm:$0xf]
      %v333 = vld [vmem:[%s274 + $0xc8] sm:$0xf]
      %v334 = vld [vmem:[%s274 + $0xcc] sm:$0xf]
      %v335 = vld [vmem:[%s274 + $0xd0] sm:$0xf]
      %v336 = vld [vmem:[%s274 + $0xd4] sm:$0xf]
      %v337 = vld [vmem:[%s274 + $0xd8] sm:$0xf]
      %v338 = vld [vmem:[%s274 + $0xdc] sm:$0xf]
      %v339 = vld [vmem:[%s274 + $0xe0] sm:$0xf]
      %v340 = vld [vmem:[%s274 + $0xe4] sm:$0xf]
      %v341 = vld [vmem:[%s274 + $0xe8] sm:$0xf]
      %v342 = vld [vmem:[%s274 + $0xec] sm:$0xf]
      %v343 = vld [vmem:[%s274 + $0xf0] sm:$0xf]
      %v344 = vld [vmem:[%s274 + $0xf4] sm:$0xf]
      %v345 = vld [vmem:[%s274 + $0xf8] sm:$0xf]
      %v346 = vld [vmem:[%s274 + $0xfc] sm:$0xf]
      %v347 = vld [vmem:[%s1] sm:$0xf]
      %v348 = vld [vmem:[%s2] sm:$0x1]
      %v350 = vperm.slane %v348, 0
      %v416 = vunpack.c.l.b16 %v283
      %v417 = vunpack.c.l.b16 %v284
      %v418 = vunpack.c.l.b16 %v285
      %v419 = vunpack.c.l.b16 %v286
      %v420 = vunpack.c.l.b16 %v287
      %v421 = vunpack.c.l.b16 %v288
      %v422 = vunpack.c.l.b16 %v289
      %v423 = vunpack.c.l.b16 %v290
      %v424 = vunpack.c.l.b16 %v291
      %v425 = vunpack.c.l.b16 %v292
      %v426 = vunpack.c.l.b16 %v293
      %v427 = vunpack.c.l.b16 %v294
      %v428 = vunpack.c.l.b16 %v295
      %v429 = vunpack.c.l.b16 %v296
      %v430 = vunpack.c.l.b16 %v297
      %v431 = vunpack.c.l.b16 %v298
      %v432 = vunpack.c.l.b16 %v299
      %v433 = vunpack.c.l.b16 %v300
      %v434 = vunpack.c.l.b16 %v301
      %v435 = vunpack.c.l.b16 %v302
      %v436 = vunpack.c.l.b16 %v303
      %v437 = vunpack.c.l.b16 %v304
      %v438 = vunpack.c.l.b16 %v305
      %v439 = vunpack.c.l.b16 %v306
      %v440 = vunpack.c.l.b16 %v307
      %v441 = vunpack.c.l.b16 %v308
      %v442 = vunpack.c.l.b16 %v309
      %v443 = vunpack.c.l.b16 %v310
      %v444 = vunpack.c.l.b16 %v311
      %v445 = vunpack.c.l.b16 %v312
      %v446 = vunpack.c.l.b16 %v313
      %v447 = vunpack.c.l.b16 %v314
      %v448 = vunpack.c.l.b16 %v315
      %v449 = vunpack.c.l.b16 %v316
      %v450 = vunpack.c.l.b16 %v317
      %v451 = vunpack.c.l.b16 %v318
      %v452 = vunpack.c.l.b16 %v319
      %v453 = vunpack.c.l.b16 %v320
      %v454 = vunpack.c.l.b16 %v321
      %v455 = vunpack.c.l.b16 %v322
      %v456 = vunpack.c.l.b16 %v323
      %v457 = vunpack.c.l.b16 %v324
      %v458 = vunpack.c.l.b16 %v325
      %v459 = vunpack.c.l.b16 %v326
      %v460 = vunpack.c.l.b16 %v327
      %v461 = vunpack.c.l.b16 %v328
      %v462 = vunpack.c.l.b16 %v329
      %v463 = vunpack.c.l.b16 %v330
      %v464 = vunpack.c.l.b16 %v331
      %v465 = vunpack.c.l.b16 %v332
      %v466 = vunpack.c.l.b16 %v333
      %v467 = vunpack.c.l.b16 %v334
      %v468 = vunpack.c.l.b16 %v335
      %v469 = vunpack.c.l.b16 %v336
      %v470 = vunpack.c.l.b16 %v337
      %v471 = vunpack.c.l.b16 %v338
      %v472 = vunpack.c.l.b16 %v339
      %v473 = vunpack.c.l.b16 %v340
      %v474 = vunpack.c.l.b16 %v341
      %v475 = vunpack.c.l.b16 %v342
      %v476 = vunpack.c.l.b16 %v343
      %v477 = vunpack.c.l.b16 %v344
      %v478 = vunpack.c.l.b16 %v345
      %v479 = vunpack.c.l.b16 %v346
      %v480 = vpack.c.b16 %v417, %v416
      %v481 = vpack.c.b16 %v419, %v418
      %v482 = vpack.c.b16 %v421, %v420
      %v483 = vpack.c.b16 %v423, %v422
      %v484 = vpack.c.b16 %v425, %v424
      %v485 = vpack.c.b16 %v427, %v426
      %v486 = vpack.c.b16 %v429, %v428
      %v487 = vpack.c.b16 %v431, %v430
      %v488 = vpack.c.b16 %v433, %v432
      %v489 = vpack.c.b16 %v435, %v434
      %v490 = vpack.c.b16 %v437, %v436
      %v491 = vpack.c.b16 %v439, %v438
      %v492 = vpack.c.b16 %v441, %v440
      %v493 = vpack.c.b16 %v443, %v442
      %v494 = vpack.c.b16 %v445, %v444
      %v495 = vpack.c.b16 %v447, %v446
      %v496 = vpack.c.b16 %v449, %v448
      %v497 = vpack.c.b16 %v451, %v450
      %v498 = vpack.c.b16 %v453, %v452
      %v499 = vpack.c.b16 %v455, %v454
      %v500 = vpack.c.b16 %v457, %v456
      %v501 = vpack.c.b16 %v459, %v458
      %v502 = vpack.c.b16 %v461, %v460
      %v503 = vpack.c.b16 %v463, %v462
      %v504 = vpack.c.b16 %v465, %v464
      %v505 = vpack.c.b16 %v467, %v466
      %v506 = vpack.c.b16 %v469, %v468
      %v507 = vpack.c.b16 %v471, %v470
      %v508 = vpack.c.b16 %v473, %v472
      %v509 = vpack.c.b16 %v475, %v474
      %v510 = vpack.c.b16 %v477, %v476
      %v511 = vpack.c.b16 %v479, %v478
      %vm512 = vcmask 64512
      %v514 = vsel %vm512, %v480, 0
      %v517 = vsel %vm512, %v481, 0
      %v520 = vsel %vm512, %v482, 0
      %v523 = vsel %vm512, %v483, 0
      %v526 = vsel %vm512, %v484, 0
      %v529 = vsel %vm512, %v485, 0
      %v532 = vsel %vm512, %v486, 0
      %v535 = vsel %vm512, %v487, 0
      %v538 = vsel %vm512, %v488, 0
      %v541 = vsel %vm512, %v489, 0
      %v544 = vsel %vm512, %v490, 0
      %v547 = vsel %vm512, %v491, 0
      %v550 = vsel %vm512, %v492, 0
      %v553 = vsel %vm512, %v493, 0
      %v556 = vsel %vm512, %v494, 0
      %v559 = vsel %vm512, %v495, 0
      %v562 = vsel %vm512, %v496, 0
      %v565 = vsel %vm512, %v497, 0
      %v568 = vsel %vm512, %v498, 0
      %v571 = vsel %vm512, %v499, 0
      %v574 = vsel %vm512, %v500, 0
      %v577 = vsel %vm512, %v501, 0
      %v580 = vsel %vm512, %v502, 0
      %v583 = vsel %vm512, %v503, 0
      %v586 = vsel %vm512, %v504, 0
      %v589 = vsel %vm512, %v505, 0
      %v592 = vsel %vm512, %v506, 0
      %v595 = vsel %vm512, %v507, 0
      %v598 = vsel %vm512, %v508, 0
      %v601 = vsel %vm512, %v509, 0
      %v604 = vsel %vm512, %v510, 0
      %v607 = vsel %vm512, %v511, 0
      %vm609 = vcmask 1043456
      %v611 = vsel %vm609, %v347, 0
      %613 = vmatpush.bf16.msra.mxu0 0
      %614 = vmatpush.bf16.msra.mxu0 0
      %615 = vmatpush.bf16.msra.mxu0 0
      %616 = vmatpush.bf16.msra.mxu0 0
      %617 = vmatpush.bf16.msra.mxu0 0
      %618 = vmatpush.bf16.msra.mxu0 0
      %619 = vmatpush.bf16.msra.mxu0 0
      %620 = vmatpush.bf16.msra.mxu0 %v611
      %621 = vmatmul.bf16.gmra.mxu0 %v514
      %v622 = vpop.f32.mrf.mxu0
      %v623 = vadd.f32 %v350, %v622
      %v624 = vpop.f32.mrf.mxu0
      %v625 = vadd.f32 %v350, %v624
      %626 = vmatmul.bf16.gmra.mxu0 %v517
      %v627 = vpop.f32.mrf.mxu0
      %v628 = vadd.f32 %v350, %v627
      %v629 = vpop.f32.mrf.mxu0
      %v630 = vadd.f32 %v350, %v629
      %631 = vmatmul.bf16.gmra.mxu0 %v520
      %v632 = vpop.f32.mrf.mxu0
      %v633 = vadd.f32 %v350, %v632
      %v634 = vpop.f32.mrf.mxu0
      %v635 = vadd.f32 %v350, %v634
      %636 = vmatmul.bf16.gmra.mxu0 %v523
      %v637 = vpop.f32.mrf.mxu0
      %v638 = vadd.f32 %v350, %v637
      %v639 = vpop.f32.mrf.mxu0
      %v640 = vadd.f32 %v350, %v639
      %641 = vmatmul.bf16.gmra.mxu0 %v526
      %v642 = vpop.f32.mrf.mxu0
      %v643 = vadd.f32 %v350, %v642
      %v644 = vpop.f32.mrf.mxu0
      %v645 = vadd.f32 %v350, %v644
      %646 = vmatmul.bf16.gmra.mxu0 %v529
      %v647 = vpop.f32.mrf.mxu0
      %v648 = vadd.f32 %v350, %v647
      %v649 = vpop.f32.mrf.mxu0
      %v650 = vadd.f32 %v350, %v649
      %651 = vmatmul.bf16.gmra.mxu0 %v532
      %v652 = vpop.f32.mrf.mxu0
      %v653 = vadd.f32 %v350, %v652
      %v654 = vpop.f32.mrf.mxu0
      %v655 = vadd.f32 %v350, %v654
      %656 = vmatmul.bf16.gmra.mxu0 %v535
      %v657 = vpop.f32.mrf.mxu0
      %v658 = vadd.f32 %v350, %v657
      %v659 = vpop.f32.mrf.mxu0
      %v660 = vadd.f32 %v350, %v659
      %661 = vmatmul.bf16.gmra.mxu0 %v538
      %v662 = vpop.f32.mrf.mxu0
      %v663 = vadd.f32 %v350, %v662
      %v664 = vpop.f32.mrf.mxu0
      %v665 = vadd.f32 %v350, %v664
      %666 = vmatmul.bf16.gmra.mxu0 %v541
      %v667 = vpop.f32.mrf.mxu0
      %v668 = vadd.f32 %v350, %v667
      %v669 = vpop.f32.mrf.mxu0
      %v670 = vadd.f32 %v350, %v669
      %671 = vmatmul.bf16.gmra.mxu0 %v544
      %v672 = vpop.f32.mrf.mxu0
      %v673 = vadd.f32 %v350, %v672
      %v674 = vpop.f32.mrf.mxu0
      %v675 = vadd.f32 %v350, %v674
      %676 = vmatmul.bf16.gmra.mxu0 %v547
      %v677 = vpop.f32.mrf.mxu0
      %v678 = vadd.f32 %v350, %v677
      %v679 = vpop.f32.mrf.mxu0
      %v680 = vadd.f32 %v350, %v679
      %681 = vmatmul.bf16.gmra.mxu0 %v550
      %v682 = vpop.f32.mrf.mxu0
      %v683 = vadd.f32 %v350, %v682
      %v684 = vpop.f32.mrf.mxu0
      %v685 = vadd.f32 %v350, %v684
      %686 = vmatmul.bf16.gmra.mxu0 %v553
      %v687 = vpop.f32.mrf.mxu0
      %v688 = vadd.f32 %v350, %v687
      %v689 = vpop.f32.mrf.mxu0
      %v690 = vadd.f32 %v350, %v689
      %691 = vmatmul.bf16.gmra.mxu0 %v556
      %v692 = vpop.f32.mrf.mxu0
      %v693 = vadd.f32 %v350, %v692
      %v694 = vpop.f32.mrf.mxu0
      %v695 = vadd.f32 %v350, %v694
      %696 = vmatmul.bf16.gmra.mxu0 %v559
      %v697 = vpop.f32.mrf.mxu0
      %v698 = vadd.f32 %v350, %v697
      %v699 = vpop.f32.mrf.mxu0
      %v700 = vadd.f32 %v350, %v699
      %701 = vmatmul.bf16.gmra.mxu0 %v562
      %v702 = vpop.f32.mrf.mxu0
      %v703 = vadd.f32 %v350, %v702
      %v704 = vpop.f32.mrf.mxu0
      %v705 = vadd.f32 %v350, %v704
      %706 = vmatmul.bf16.gmra.mxu0 %v565
      %v707 = vpop.f32.mrf.mxu0
      %v708 = vadd.f32 %v350, %v707
      %v709 = vpop.f32.mrf.mxu0
      %v710 = vadd.f32 %v350, %v709
      %711 = vmatmul.bf16.gmra.mxu0 %v568
      %v712 = vpop.f32.mrf.mxu0
      %v713 = vadd.f32 %v350, %v712
      %v714 = vpop.f32.mrf.mxu0
      %v715 = vadd.f32 %v350, %v714
      %716 = vmatmul.bf16.gmra.mxu0 %v571
      %v717 = vpop.f32.mrf.mxu0
      %v718 = vadd.f32 %v350, %v717
      %v719 = vpop.f32.mrf.mxu0
      %v720 = vadd.f32 %v350, %v719
      %721 = vmatmul.bf16.gmra.mxu0 %v574
      %v722 = vpop.f32.mrf.mxu0
      %v723 = vadd.f32 %v350, %v722
      %v724 = vpop.f32.mrf.mxu0
      %v725 = vadd.f32 %v350, %v724
      %726 = vmatmul.bf16.gmra.mxu0 %v577
      %v727 = vpop.f32.mrf.mxu0
      %v728 = vadd.f32 %v350, %v727
      %v729 = vpop.f32.mrf.mxu0
      %v730 = vadd.f32 %v350, %v729
      %731 = vmatmul.bf16.gmra.mxu0 %v580
      %v732 = vpop.f32.mrf.mxu0
      %v733 = vadd.f32 %v350, %v732
      %v734 = vpop.f32.mrf.mxu0
      %v735 = vadd.f32 %v350, %v734
      %736 = vmatmul.bf16.gmra.mxu0 %v583
      %v737 = vpop.f32.mrf.mxu0
      %v738 = vadd.f32 %v350, %v737
      %v739 = vpop.f32.mrf.mxu0
      %v740 = vadd.f32 %v350, %v739
      %741 = vmatmul.bf16.gmra.mxu0 %v586
      %v742 = vpop.f32.mrf.mxu0
      %v743 = vadd.f32 %v350, %v742
      %v744 = vpop.f32.mrf.mxu0
      %v745 = vadd.f32 %v350, %v744
      %746 = vmatmul.bf16.gmra.mxu0 %v589
      %v747 = vpop.f32.mrf.mxu0
      %v748 = vadd.f32 %v350, %v747
      %v749 = vpop.f32.mrf.mxu0
      %v750 = vadd.f32 %v350, %v749
      %751 = vmatmul.bf16.gmra.mxu0 %v592
      %v752 = vpop.f32.mrf.mxu0
      %v753 = vadd.f32 %v350, %v752
      %v754 = vpop.f32.mrf.mxu0
      %v755 = vadd.f32 %v350, %v754
      %756 = vmatmul.bf16.gmra.mxu0 %v595
      %v757 = vpop.f32.mrf.mxu0
      %v758 = vadd.f32 %v350, %v757
      %v759 = vpop.f32.mrf.mxu0
      %v760 = vadd.f32 %v350, %v759
      %761 = vmatmul.bf16.gmra.mxu0 %v598
      %v762 = vpop.f32.mrf.mxu0
      %v763 = vadd.f32 %v350, %v762
      %v764 = vpop.f32.mrf.mxu0
      %v765 = vadd.f32 %v350, %v764
      %766 = vmatmul.bf16.gmra.mxu0 %v601
      %v767 = vpop.f32.mrf.mxu0
      %v768 = vadd.f32 %v350, %v767
      %v769 = vpop.f32.mrf.mxu0
      %v770 = vadd.f32 %v350, %v769
      %771 = vmatmul.bf16.gmra.mxu0 %v604
      %v772 = vpop.f32.mrf.mxu0
      %v773 = vadd.f32 %v350, %v772
      %v774 = vpop.f32.mrf.mxu0
      %v775 = vadd.f32 %v350, %v774
      %776 = vmatmul.bf16.gmra.mxu0 %v607
      %v777 = vpop.f32.mrf.mxu0
      %v778 = vadd.f32 %v350, %v777
      %v779 = vpop.f32.mrf.mxu0
      %v780 = vadd.f32 %v350, %v779
      %781 = vdwg.mxu0
      %v782 = vmax.f32 %v623, 0.0
      %v783 = vmax.f32 %v625, 0.0
      %v784 = vmax.f32 %v628, 0.0
      %v785 = vmax.f32 %v630, 0.0
      %v786 = vmax.f32 %v633, 0.0
      %v787 = vmax.f32 %v635, 0.0
      %v788 = vmax.f32 %v638, 0.0
      %v789 = vmax.f32 %v640, 0.0
      %v790 = vmax.f32 %v643, 0.0
      %v791 = vmax.f32 %v645, 0.0
      %v792 = vmax.f32 %v648, 0.0
      %v793 = vmax.f32 %v650, 0.0
      %v794 = vmax.f32 %v653, 0.0
      %v795 = vmax.f32 %v655, 0.0
      %v796 = vmax.f32 %v658, 0.0
      %v797 = vmax.f32 %v660, 0.0
      %v798 = vmax.f32 %v663, 0.0
      %v799 = vmax.f32 %v665, 0.0
      %v800 = vmax.f32 %v668, 0.0
      %v801 = vmax.f32 %v670, 0.0
      %v802 = vmax.f32 %v673, 0.0
      %v803 = vmax.f32 %v675, 0.0
      %v804 = vmax.f32 %v678, 0.0
      %v805 = vmax.f32 %v680, 0.0
      %v806 = vmax.f32 %v683, 0.0
      %v807 = vmax.f32 %v685, 0.0
      %v808 = vmax.f32 %v688, 0.0
      %v809 = vmax.f32 %v690, 0.0
      %v810 = vmax.f32 %v693, 0.0
      %v811 = vmax.f32 %v695, 0.0
      %v812 = vmax.f32 %v698, 0.0
      %v813 = vmax.f32 %v700, 0.0
      %v814 = vmax.f32 %v703, 0.0
      %v815 = vmax.f32 %v705, 0.0
      %v816 = vmax.f32 %v708, 0.0
      %v817 = vmax.f32 %v710, 0.0
      %v818 = vmax.f32 %v713, 0.0
      %v819 = vmax.f32 %v715, 0.0
      %v820 = vmax.f32 %v718, 0.0
      %v821 = vmax.f32 %v720, 0.0
      %v822 = vmax.f32 %v723, 0.0
      %v823 = vmax.f32 %v725, 0.0
      %v824 = vmax.f32 %v728, 0.0
      %v825 = vmax.f32 %v730, 0.0
      %v826 = vmax.f32 %v733, 0.0
      %v827 = vmax.f32 %v735, 0.0
      %v828 = vmax.f32 %v738, 0.0
      %v829 = vmax.f32 %v740, 0.0
      %v830 = vmax.f32 %v743, 0.0
      %v831 = vmax.f32 %v745, 0.0
      %v832 = vmax.f32 %v748, 0.0
      %v833 = vmax.f32 %v750, 0.0
      %v834 = vmax.f32 %v753, 0.0
      %v835 = vmax.f32 %v755, 0.0
      %v836 = vmax.f32 %v758, 0.0
      %v837 = vmax.f32 %v760, 0.0
      %v838 = vmax.f32 %v763, 0.0
      %v839 = vmax.f32 %v765, 0.0
      %v840 = vmax.f32 %v768, 0.0
      %v841 = vmax.f32 %v770, 0.0
      %v842 = vmax.f32 %v773, 0.0
      %v843 = vmax.f32 %v775, 0.0
      %v844 = vmax.f32 %v778, 0.0
      %v845 = vmax.f32 %v780, 0.0
      %v846 = vpack.c.bf16 %v783, %v782
      %v847 = vpack.c.bf16 %v785, %v784
      %v848 = vpack.c.bf16 %v787, %v786
      %v849 = vpack.c.bf16 %v789, %v788
      %v850 = vpack.c.bf16 %v791, %v790
      %v851 = vpack.c.bf16 %v793, %v792
      %v852 = vpack.c.bf16 %v795, %v794
      %v853 = vpack.c.bf16 %v797, %v796
      %v854 = vpack.c.bf16 %v799, %v798
      %v855 = vpack.c.bf16 %v801, %v800
      %v856 = vpack.c.bf16 %v803, %v802
      %v857 = vpack.c.bf16 %v805, %v804
      %v858 = vpack.c.bf16 %v807, %v806
      %v859 = vpack.c.bf16 %v809, %v808
      %v860 = vpack.c.bf16 %v811, %v810
      %v861 = vpack.c.bf16 %v813, %v812
      %v862 = vpack.c.bf16 %v815, %v814
      %v863 = vpack.c.bf16 %v817, %v816
      %v864 = vpack.c.bf16 %v819, %v818
      %v865 = vpack.c.bf16 %v821, %v820
      %v866 = vpack.c.bf16 %v823, %v822
      %v867 = vpack.c.bf16 %v825, %v824
      %v868 = vpack.c.bf16 %v827, %v826
      %v869 = vpack.c.bf16 %v829, %v828
      %v870 = vpack.c.bf16 %v831, %v830
      %v871 = vpack.c.bf16 %v833, %v832
      %v872 = vpack.c.bf16 %v835, %v834
      %v873 = vpack.c.bf16 %v837, %v836
      %v874 = vpack.c.bf16 %v839, %v838
      %v875 = vpack.c.bf16 %v841, %v840
      %v876 = vpack.c.bf16 %v843, %v842
      %v877 = vpack.c.bf16 %v845, %v844
      %v878 = vld [vmem:[%s3] sm:$0xf]
      %v879 = vld [vmem:[%s3 + $0x4] sm:$0xf]
      %v880 = vld [vmem:[%s3 + $0x8] sm:$0xf]
      %v881 = vld [vmem:[%s3 + $0xc] sm:$0xf]
      %v882 = vld [vmem:[%s3 + $0x10] sm:$0xf]
      %v883 = vld [vmem:[%s3 + $0x14] sm:$0xf]
      %v884 = vld [vmem:[%s3 + $0x18] sm:$0xf]
      %v885 = vld [vmem:[%s3 + $0x1c] sm:$0xf]
      %v886 = vld [vmem:[%s3 + $0x20] sm:$0xf]
      %v887 = vld [vmem:[%s3 + $0x24] sm:$0xf]
      %v888 = vld [vmem:[%s3 + $0x28] sm:$0xf]
      %v889 = vld [vmem:[%s3 + $0x2c] sm:$0xf]
      %v890 = vld [vmem:[%s3 + $0x30] sm:$0xf]
      %v891 = vld [vmem:[%s3 + $0x34] sm:$0xf]
      %v892 = vld [vmem:[%s3 + $0x38] sm:$0xf]
      %v893 = vld [vmem:[%s3 + $0x3c] sm:$0xf]
      %v894 = vld [vmem:[%s4] sm:$0x1]
      %v896 = vperm.slane %v894, 0
      %v914 = vunpack.c.l.b16 %v878
      %v915 = vunpack.c.l.b16 %v879
      %v916 = vunpack.c.l.b16 %v880
      %v917 = vunpack.c.l.b16 %v881
      %v918 = vunpack.c.l.b16 %v882
      %v919 = vunpack.c.l.b16 %v883
      %v920 = vunpack.c.l.b16 %v884
      %v921 = vunpack.c.l.b16 %v885
      %v922 = vunpack.c.l.b16 %v886
      %v923 = vunpack.c.l.b16 %v887
      %v924 = vunpack.c.l.b16 %v888
      %v925 = vunpack.c.l.b16 %v889
      %v926 = vunpack.c.l.b16 %v890
      %v927 = vunpack.c.l.b16 %v891
      %v928 = vunpack.c.l.b16 %v892
      %v929 = vunpack.c.l.b16 %v893
      %v930 = vpack.c.b16 %v915, %v914
      %v931 = vpack.c.b16 %v917, %v916
      %v932 = vpack.c.b16 %v919, %v918
      %v933 = vpack.c.b16 %v921, %v920
      %v934 = vpack.c.b16 %v923, %v922
      %v935 = vpack.c.b16 %v925, %v924
      %v936 = vpack.c.b16 %v927, %v926
      %v937 = vpack.c.b16 %v929, %v928
      %946 = vmatpush.bf16.msra.mxu0 %v937
      %947 = vmatpush.bf16.msra.mxu0 %v936
      %948 = vmatpush.bf16.msra.mxu0 %v935
      %949 = vmatpush.bf16.msra.mxu0 %v934
      %950 = vmatpush.bf16.msra.mxu0 %v933
      %951 = vmatpush.bf16.msra.mxu0 %v932
      %952 = vmatpush.bf16.msra.mxu0 %v931
      %953 = vmatpush.bf16.msra.mxu0 %v930
      %954 = vmatmul.bf16.gmra.mxu0 %v846
      %v955 = vpop.f32.mrf.mxu0
      %v956 = vadd.f32 %v896, %v955
      %v957 = vpop.f32.mrf.mxu0
      %v958 = vadd.f32 %v896, %v957
      %959 = vmatmul.bf16.gmra.mxu0 %v847
      %v960 = vpop.f32.mrf.mxu0
      %v961 = vadd.f32 %v896, %v960
      %v962 = vpop.f32.mrf.mxu0
      %v963 = vadd.f32 %v896, %v962
      %964 = vmatmul.bf16.gmra.mxu0 %v848
      %v965 = vpop.f32.mrf.mxu0
      %v966 = vadd.f32 %v896, %v965
      %v967 = vpop.f32.mrf.mxu0
      %v968 = vadd.f32 %v896, %v967
      %969 = vmatmul.bf16.gmra.mxu0 %v849
      %v970 = vpop.f32.mrf.mxu0
      %v971 = vadd.f32 %v896, %v970
      %v972 = vpop.f32.mrf.mxu0
      %v973 = vadd.f32 %v896, %v972
      %974 = vmatmul.bf16.gmra.mxu0 %v850
      %v975 = vpop.f32.mrf.mxu0
      %v976 = vadd.f32 %v896, %v975
      %v977 = vpop.f32.mrf.mxu0
      %v978 = vadd.f32 %v896, %v977
      %979 = vmatmul.bf16.gmra.mxu0 %v851
      %v980 = vpop.f32.mrf.mxu0
      %v981 = vadd.f32 %v896, %v980
      %v982 = vpop.f32.mrf.mxu0
      %v983 = vadd.f32 %v896, %v982
      %984 = vmatmul.bf16.gmra.mxu0 %v852
      %v985 = vpop.f32.mrf.mxu0
      %v986 = vadd.f32 %v896, %v985
      %v987 = vpop.f32.mrf.mxu0
      %v988 = vadd.f32 %v896, %v987
      %989 = vmatmul.bf16.gmra.mxu0 %v853
      %v990 = vpop.f32.mrf.mxu0
      %v991 = vadd.f32 %v896, %v990
      %v992 = vpop.f32.mrf.mxu0
      %v993 = vadd.f32 %v896, %v992
      %994 = vmatmul.bf16.gmra.mxu0 %v854
      %v995 = vpop.f32.mrf.mxu0
      %v996 = vadd.f32 %v896, %v995
      %v997 = vpop.f32.mrf.mxu0
      %v998 = vadd.f32 %v896, %v997
      %999 = vmatmul.bf16.gmra.mxu0 %v855
      %v1000 = vpop.f32.mrf.mxu0
      %v1001 = vadd.f32 %v896, %v1000
      %v1002 = vpop.f32.mrf.mxu0
      %v1003 = vadd.f32 %v896, %v1002
      %1004 = vmatmul.bf16.gmra.mxu0 %v856
      %v1005 = vpop.f32.mrf.mxu0
      %v1006 = vadd.f32 %v896, %v1005
      %v1007 = vpop.f32.mrf.mxu0
      %v1008 = vadd.f32 %v896, %v1007
      %1009 = vmatmul.bf16.gmra.mxu0 %v857
      %v1010 = vpop.f32.mrf.mxu0
      %v1011 = vadd.f32 %v896, %v1010
      %v1012 = vpop.f32.mrf.mxu0
      %v1013 = vadd.f32 %v896, %v1012
      %1014 = vmatmul.bf16.gmra.mxu0 %v858
      %v1015 = vpop.f32.mrf.mxu0
      %v1016 = vadd.f32 %v896, %v1015
      %v1017 = vpop.f32.mrf.mxu0
      %v1018 = vadd.f32 %v896, %v1017
      %1019 = vmatmul.bf16.gmra.mxu0 %v859
      %v1020 = vpop.f32.mrf.mxu0
      %v1021 = vadd.f32 %v896, %v1020
      %v1022 = vpop.f32.mrf.mxu0
      %v1023 = vadd.f32 %v896, %v1022
      %1024 = vmatmul.bf16.gmra.mxu0 %v860
      %v1025 = vpop.f32.mrf.mxu0
      %v1026 = vadd.f32 %v896, %v1025
      %v1027 = vpop.f32.mrf.mxu0
      %v1028 = vadd.f32 %v896, %v1027
      %1029 = vmatmul.bf16.gmra.mxu0 %v861
      %v1030 = vpop.f32.mrf.mxu0
      %v1031 = vadd.f32 %v896, %v1030
      %v1032 = vpop.f32.mrf.mxu0
      %v1033 = vadd.f32 %v896, %v1032
      %1034 = vmatmul.bf16.gmra.mxu0 %v862
      %v1035 = vpop.f32.mrf.mxu0
      %v1036 = vadd.f32 %v896, %v1035
      %v1037 = vpop.f32.mrf.mxu0
      %v1038 = vadd.f32 %v896, %v1037
      %1039 = vmatmul.bf16.gmra.mxu0 %v863
      %v1040 = vpop.f32.mrf.mxu0
      %v1041 = vadd.f32 %v896, %v1040
      %v1042 = vpop.f32.mrf.mxu0
      %v1043 = vadd.f32 %v896, %v1042
      %1044 = vmatmul.bf16.gmra.mxu0 %v864
      %v1045 = vpop.f32.mrf.mxu0
      %v1046 = vadd.f32 %v896, %v1045
      %v1047 = vpop.f32.mrf.mxu0
      %v1048 = vadd.f32 %v896, %v1047
      %1049 = vmatmul.bf16.gmra.mxu0 %v865
      %v1050 = vpop.f32.mrf.mxu0
      %v1051 = vadd.f32 %v896, %v1050
      %v1052 = vpop.f32.mrf.mxu0
      %v1053 = vadd.f32 %v896, %v1052
      %1054 = vmatmul.bf16.gmra.mxu0 %v866
      %v1055 = vpop.f32.mrf.mxu0
      %v1056 = vadd.f32 %v896, %v1055
      %v1057 = vpop.f32.mrf.mxu0
      %v1058 = vadd.f32 %v896, %v1057
      %1059 = vmatmul.bf16.gmra.mxu0 %v867
      %v1060 = vpop.f32.mrf.mxu0
      %v1061 = vadd.f32 %v896, %v1060
      %v1062 = vpop.f32.mrf.mxu0
      %v1063 = vadd.f32 %v896, %v1062
      %1064 = vmatmul.bf16.gmra.mxu0 %v868
      %v1065 = vpop.f32.mrf.mxu0
      %v1066 = vadd.f32 %v896, %v1065
      %v1067 = vpop.f32.mrf.mxu0
      %v1068 = vadd.f32 %v896, %v1067
      %1069 = vmatmul.bf16.gmra.mxu0 %v869
      %v1070 = vpop.f32.mrf.mxu0
      %v1071 = vadd.f32 %v896, %v1070
      %v1072 = vpop.f32.mrf.mxu0
      %v1073 = vadd.f32 %v896, %v1072
      %1074 = vmatmul.bf16.gmra.mxu0 %v870
      %v1075 = vpop.f32.mrf.mxu0
      %v1076 = vadd.f32 %v896, %v1075
      %v1077 = vpop.f32.mrf.mxu0
      %v1078 = vadd.f32 %v896, %v1077
      %1079 = vmatmul.bf16.gmra.mxu0 %v871
      %v1080 = vpop.f32.mrf.mxu0
      %v1081 = vadd.f32 %v896, %v1080
      %v1082 = vpop.f32.mrf.mxu0
      %v1083 = vadd.f32 %v896, %v1082
      %1084 = vmatmul.bf16.gmra.mxu0 %v872
      %v1085 = vpop.f32.mrf.mxu0
      %v1086 = vadd.f32 %v896, %v1085
      %v1087 = vpop.f32.mrf.mxu0
      %v1088 = vadd.f32 %v896, %v1087
      %1089 = vmatmul.bf16.gmra.mxu0 %v873
      %v1090 = vpop.f32.mrf.mxu0
      %v1091 = vadd.f32 %v896, %v1090
      %v1092 = vpop.f32.mrf.mxu0
      %v1093 = vadd.f32 %v896, %v1092
      %1094 = vmatmul.bf16.gmra.mxu0 %v874
      %v1095 = vpop.f32.mrf.mxu0
      %v1096 = vadd.f32 %v896, %v1095
      %v1097 = vpop.f32.mrf.mxu0
      %v1098 = vadd.f32 %v896, %v1097
      %1099 = vmatmul.bf16.gmra.mxu0 %v875
      %v1100 = vpop.f32.mrf.mxu0
      %v1101 = vadd.f32 %v896, %v1100
      %v1102 = vpop.f32.mrf.mxu0
      %v1103 = vadd.f32 %v896, %v1102
      %1104 = vmatmul.bf16.gmra.mxu0 %v876
      %v1105 = vpop.f32.mrf.mxu0
      %v1106 = vadd.f32 %v896, %v1105
      %v1107 = vpop.f32.mrf.mxu0
      %v1108 = vadd.f32 %v896, %v1107
      %1109 = vmatmul.bf16.gmra.mxu0 %v877
      %v1110 = vpop.f32.mrf.mxu0
      %v1111 = vadd.f32 %v896, %v1110
      %v1112 = vpop.f32.mrf.mxu0
      %v1113 = vadd.f32 %v896, %v1112
      %1114 = vdwg.mxu0
      %v1115 = vmax.f32 %v956, 0.0
      %v1116 = vmax.f32 %v958, 0.0
      %v1117 = vmax.f32 %v961, 0.0
      %v1118 = vmax.f32 %v963, 0.0
      %v1119 = vmax.f32 %v966, 0.0
      %v1120 = vmax.f32 %v968, 0.0
      %v1121 = vmax.f32 %v971, 0.0
      %v1122 = vmax.f32 %v973, 0.0
      %v1123 = vmax.f32 %v976, 0.0
      %v1124 = vmax.f32 %v978, 0.0
      %v1125 = vmax.f32 %v981, 0.0
      %v1126 = vmax.f32 %v983, 0.0
      %v1127 = vmax.f32 %v986, 0.0
      %v1128 = vmax.f32 %v988, 0.0
      %v1129 = vmax.f32 %v991, 0.0
      %v1130 = vmax.f32 %v993, 0.0
      %v1131 = vmax.f32 %v996, 0.0
      %v1132 = vmax.f32 %v998, 0.0
      %v1133 = vmax.f32 %v1001, 0.0
      %v1134 = vmax.f32 %v1003, 0.0
      %v1135 = vmax.f32 %v1006, 0.0
      %v1136 = vmax.f32 %v1008, 0.0
      %v1137 = vmax.f32 %v1011, 0.0
      %v1138 = vmax.f32 %v1013, 0.0
      %v1139 = vmax.f32 %v1016, 0.0
      %v1140 = vmax.f32 %v1018, 0.0
      %v1141 = vmax.f32 %v1021, 0.0
      %v1142 = vmax.f32 %v1023, 0.0
      %v1143 = vmax.f32 %v1026, 0.0
      %v1144 = vmax.f32 %v1028, 0.0
      %v1145 = vmax.f32 %v1031, 0.0
      %v1146 = vmax.f32 %v1033, 0.0
      %v1147 = vmax.f32 %v1036, 0.0
      %v1148 = vmax.f32 %v1038, 0.0
      %v1149 = vmax.f32 %v1041, 0.0
      %v1150 = vmax.f32 %v1043, 0.0
      %v1151 = vmax.f32 %v1046, 0.0
      %v1152 = vmax.f32 %v1048, 0.0
      %v1153 = vmax.f32 %v1051, 0.0
      %v1154 = vmax.f32 %v1053, 0.0
      %v1155 = vmax.f32 %v1056, 0.0
      %v1156 = vmax.f32 %v1058, 0.0
      %v1157 = vmax.f32 %v1061, 0.0
      %v1158 = vmax.f32 %v1063, 0.0
      %v1159 = vmax.f32 %v1066, 0.0
      %v1160 = vmax.f32 %v1068, 0.0
      %v1161 = vmax.f32 %v1071, 0.0
      %v1162 = vmax.f32 %v1073, 0.0
      %v1163 = vmax.f32 %v1076, 0.0
      %v1164 = vmax.f32 %v1078, 0.0
      %v1165 = vmax.f32 %v1081, 0.0
      %v1166 = vmax.f32 %v1083, 0.0
      %v1167 = vmax.f32 %v1086, 0.0
      %v1168 = vmax.f32 %v1088, 0.0
      %v1169 = vmax.f32 %v1091, 0.0
      %v1170 = vmax.f32 %v1093, 0.0
      %v1171 = vmax.f32 %v1096, 0.0
      %v1172 = vmax.f32 %v1098, 0.0
      %v1173 = vmax.f32 %v1101, 0.0
      %v1174 = vmax.f32 %v1103, 0.0
      %v1175 = vmax.f32 %v1106, 0.0
      %v1176 = vmax.f32 %v1108, 0.0
      %v1177 = vmax.f32 %v1111, 0.0
      %v1178 = vmax.f32 %v1113, 0.0
      %v1179 = vpack.c.bf16 %v1116, %v1115
      %v1180 = vpack.c.bf16 %v1118, %v1117
      %v1181 = vpack.c.bf16 %v1120, %v1119
      %v1182 = vpack.c.bf16 %v1122, %v1121
      %v1183 = vpack.c.bf16 %v1124, %v1123
      %v1184 = vpack.c.bf16 %v1126, %v1125
      %v1185 = vpack.c.bf16 %v1128, %v1127
      %v1186 = vpack.c.bf16 %v1130, %v1129
      %v1187 = vpack.c.bf16 %v1132, %v1131
      %v1188 = vpack.c.bf16 %v1134, %v1133
      %v1189 = vpack.c.bf16 %v1136, %v1135
      %v1190 = vpack.c.bf16 %v1138, %v1137
      %v1191 = vpack.c.bf16 %v1140, %v1139
      %v1192 = vpack.c.bf16 %v1142, %v1141
      %v1193 = vpack.c.bf16 %v1144, %v1143
      %v1194 = vpack.c.bf16 %v1146, %v1145
      %v1195 = vpack.c.bf16 %v1148, %v1147
      %v1196 = vpack.c.bf16 %v1150, %v1149
      %v1197 = vpack.c.bf16 %v1152, %v1151
      %v1198 = vpack.c.bf16 %v1154, %v1153
      %v1199 = vpack.c.bf16 %v1156, %v1155
      %v1200 = vpack.c.bf16 %v1158, %v1157
      %v1201 = vpack.c.bf16 %v1160, %v1159
      %v1202 = vpack.c.bf16 %v1162, %v1161
      %v1203 = vpack.c.bf16 %v1164, %v1163
      %v1204 = vpack.c.bf16 %v1166, %v1165
      %v1205 = vpack.c.bf16 %v1168, %v1167
      %v1206 = vpack.c.bf16 %v1170, %v1169
      %v1207 = vpack.c.bf16 %v1172, %v1171
      %v1208 = vpack.c.bf16 %v1174, %v1173
      %v1209 = vpack.c.bf16 %v1176, %v1175
      %v1210 = vpack.c.bf16 %v1178, %v1177
      %v1211 = vld [vmem:[%s5] sm:$0xf]
      %v1212 = vld [vmem:[%s5 + $0x4] sm:$0xf]
      %v1213 = vld [vmem:[%s5 + $0x8] sm:$0xf]
      %v1214 = vld [vmem:[%s5 + $0xc] sm:$0xf]
      %v1215 = vld [vmem:[%s5 + $0x10] sm:$0xf]
      %v1216 = vld [vmem:[%s5 + $0x14] sm:$0xf]
      %v1217 = vld [vmem:[%s5 + $0x18] sm:$0xf]
      %v1218 = vld [vmem:[%s5 + $0x1c] sm:$0xf]
      %v1219 = vld [vmem:[%s5 + $0x20] sm:$0xf]
      %v1220 = vld [vmem:[%s5 + $0x24] sm:$0xf]
      %v1221 = vld [vmem:[%s5 + $0x28] sm:$0xf]
      %v1222 = vld [vmem:[%s5 + $0x2c] sm:$0xf]
      %v1223 = vld [vmem:[%s5 + $0x30] sm:$0xf]
      %v1224 = vld [vmem:[%s5 + $0x34] sm:$0xf]
      %v1225 = vld [vmem:[%s5 + $0x38] sm:$0xf]
      %v1226 = vld [vmem:[%s5 + $0x3c] sm:$0xf]
      %v1227 = vld [vmem:[%s6] sm:$0x1]
      %v1229 = vperm.slane %v1227, 0
      %v1247 = vunpack.c.l.b16 %v1211
      %v1248 = vunpack.c.l.b16 %v1212
      %v1249 = vunpack.c.l.b16 %v1213
      %v1250 = vunpack.c.l.b16 %v1214
      %v1251 = vunpack.c.l.b16 %v1215
      %v1252 = vunpack.c.l.b16 %v1216
      %v1253 = vunpack.c.l.b16 %v1217
      %v1254 = vunpack.c.l.b16 %v1218
      %v1255 = vunpack.c.l.b16 %v1219
      %v1256 = vunpack.c.l.b16 %v1220
      %v1257 = vunpack.c.l.b16 %v1221
      %v1258 = vunpack.c.l.b16 %v1222
      %v1259 = vunpack.c.l.b16 %v1223
      %v1260 = vunpack.c.l.b16 %v1224
      %v1261 = vunpack.c.l.b16 %v1225
      %v1262 = vunpack.c.l.b16 %v1226
      %v1263 = vpack.c.b16 %v1248, %v1247
      %v1264 = vpack.c.b16 %v1250, %v1249
      %v1265 = vpack.c.b16 %v1252, %v1251
      %v1266 = vpack.c.b16 %v1254, %v1253
      %v1267 = vpack.c.b16 %v1256, %v1255
      %v1268 = vpack.c.b16 %v1258, %v1257
      %v1269 = vpack.c.b16 %v1260, %v1259
      %v1270 = vpack.c.b16 %v1262, %v1261
      %1279 = vmatpush.bf16.msra.mxu0 %v1270
      %1280 = vmatpush.bf16.msra.mxu0 %v1269
      %1281 = vmatpush.bf16.msra.mxu0 %v1268
      %1282 = vmatpush.bf16.msra.mxu0 %v1267
      %1283 = vmatpush.bf16.msra.mxu0 %v1266
      %1284 = vmatpush.bf16.msra.mxu0 %v1265
      %1285 = vmatpush.bf16.msra.mxu0 %v1264
      %1286 = vmatpush.bf16.msra.mxu0 %v1263
      %1287 = vmatmul.bf16.gmra.mxu0 %v1179
      %v1288 = vpop.f32.mrf.mxu0
      %v1289 = vadd.f32 %v1229, %v1288
      %v1290 = vpop.f32.mrf.mxu0
      %v1291 = vadd.f32 %v1229, %v1290
      %1292 = vmatmul.bf16.gmra.mxu0 %v1180
      %v1293 = vpop.f32.mrf.mxu0
      %v1294 = vadd.f32 %v1229, %v1293
      %v1295 = vpop.f32.mrf.mxu0
      %v1296 = vadd.f32 %v1229, %v1295
      %1297 = vmatmul.bf16.gmra.mxu0 %v1181
      %v1298 = vpop.f32.mrf.mxu0
      %v1299 = vadd.f32 %v1229, %v1298
      %v1300 = vpop.f32.mrf.mxu0
      %v1301 = vadd.f32 %v1229, %v1300
      %1302 = vmatmul.bf16.gmra.mxu0 %v1182
      %v1303 = vpop.f32.mrf.mxu0
      %v1304 = vadd.f32 %v1229, %v1303
      %v1305 = vpop.f32.mrf.mxu0
      %v1306 = vadd.f32 %v1229, %v1305
      %1307 = vmatmul.bf16.gmra.mxu0 %v1183
      %v1308 = vpop.f32.mrf.mxu0
      %v1309 = vadd.f32 %v1229, %v1308
      %v1310 = vpop.f32.mrf.mxu0
      %v1311 = vadd.f32 %v1229, %v1310
      %1312 = vmatmul.bf16.gmra.mxu0 %v1184
      %v1313 = vpop.f32.mrf.mxu0
      %v1314 = vadd.f32 %v1229, %v1313
      %v1315 = vpop.f32.mrf.mxu0
      %v1316 = vadd.f32 %v1229, %v1315
      %1317 = vmatmul.bf16.gmra.mxu0 %v1185
      %v1318 = vpop.f32.mrf.mxu0
      %v1319 = vadd.f32 %v1229, %v1318
      %v1320 = vpop.f32.mrf.mxu0
      %v1321 = vadd.f32 %v1229, %v1320
      %1322 = vmatmul.bf16.gmra.mxu0 %v1186
      %v1323 = vpop.f32.mrf.mxu0
      %v1324 = vadd.f32 %v1229, %v1323
      %v1325 = vpop.f32.mrf.mxu0
      %v1326 = vadd.f32 %v1229, %v1325
      %1327 = vmatmul.bf16.gmra.mxu0 %v1187
      %v1328 = vpop.f32.mrf.mxu0
      %v1329 = vadd.f32 %v1229, %v1328
      %v1330 = vpop.f32.mrf.mxu0
      %v1331 = vadd.f32 %v1229, %v1330
      %1332 = vmatmul.bf16.gmra.mxu0 %v1188
      %v1333 = vpop.f32.mrf.mxu0
      %v1334 = vadd.f32 %v1229, %v1333
      %v1335 = vpop.f32.mrf.mxu0
      %v1336 = vadd.f32 %v1229, %v1335
      %1337 = vmatmul.bf16.gmra.mxu0 %v1189
      %v1338 = vpop.f32.mrf.mxu0
      %v1339 = vadd.f32 %v1229, %v1338
      %v1340 = vpop.f32.mrf.mxu0
      %v1341 = vadd.f32 %v1229, %v1340
      %1342 = vmatmul.bf16.gmra.mxu0 %v1190
      %v1343 = vpop.f32.mrf.mxu0
      %v1344 = vadd.f32 %v1229, %v1343
      %v1345 = vpop.f32.mrf.mxu0
      %v1346 = vadd.f32 %v1229, %v1345
      %1347 = vmatmul.bf16.gmra.mxu0 %v1191
      %v1348 = vpop.f32.mrf.mxu0
      %v1349 = vadd.f32 %v1229, %v1348
      %v1350 = vpop.f32.mrf.mxu0
      %v1351 = vadd.f32 %v1229, %v1350
      %1352 = vmatmul.bf16.gmra.mxu0 %v1192
      %v1353 = vpop.f32.mrf.mxu0
      %v1354 = vadd.f32 %v1229, %v1353
      %v1355 = vpop.f32.mrf.mxu0
      %v1356 = vadd.f32 %v1229, %v1355
      %1357 = vmatmul.bf16.gmra.mxu0 %v1193
      %v1358 = vpop.f32.mrf.mxu0
      %v1359 = vadd.f32 %v1229, %v1358
      %v1360 = vpop.f32.mrf.mxu0
      %v1361 = vadd.f32 %v1229, %v1360
      %1362 = vmatmul.bf16.gmra.mxu0 %v1194
      %v1363 = vpop.f32.mrf.mxu0
      %v1364 = vadd.f32 %v1229, %v1363
      %v1365 = vpop.f32.mrf.mxu0
      %v1366 = vadd.f32 %v1229, %v1365
      %1367 = vmatmul.bf16.gmra.mxu0 %v1195
      %v1368 = vpop.f32.mrf.mxu0
      %v1369 = vadd.f32 %v1229, %v1368
      %v1370 = vpop.f32.mrf.mxu0
      %v1371 = vadd.f32 %v1229, %v1370
      %1372 = vmatmul.bf16.gmra.mxu0 %v1196
      %v1373 = vpop.f32.mrf.mxu0
      %v1374 = vadd.f32 %v1229, %v1373
      %v1375 = vpop.f32.mrf.mxu0
      %v1376 = vadd.f32 %v1229, %v1375
      %1377 = vmatmul.bf16.gmra.mxu0 %v1197
      %v1378 = vpop.f32.mrf.mxu0
      %v1379 = vadd.f32 %v1229, %v1378
      %v1380 = vpop.f32.mrf.mxu0
      %v1381 = vadd.f32 %v1229, %v1380
      %1382 = vmatmul.bf16.gmra.mxu0 %v1198
      %v1383 = vpop.f32.mrf.mxu0
      %v1384 = vadd.f32 %v1229, %v1383
      %v1385 = vpop.f32.mrf.mxu0
      %v1386 = vadd.f32 %v1229, %v1385
      %1387 = vmatmul.bf16.gmra.mxu0 %v1199
      %v1388 = vpop.f32.mrf.mxu0
      %v1389 = vadd.f32 %v1229, %v1388
      %v1390 = vpop.f32.mrf.mxu0
      %v1391 = vadd.f32 %v1229, %v1390
      %1392 = vmatmul.bf16.gmra.mxu0 %v1200
      %v1393 = vpop.f32.mrf.mxu0
      %v1394 = vadd.f32 %v1229, %v1393
      %v1395 = vpop.f32.mrf.mxu0
      %v1396 = vadd.f32 %v1229, %v1395
      %1397 = vmatmul.bf16.gmra.mxu0 %v1201
      %v1398 = vpop.f32.mrf.mxu0
      %v1399 = vadd.f32 %v1229, %v1398
      %v1400 = vpop.f32.mrf.mxu0
      %v1401 = vadd.f32 %v1229, %v1400
      %1402 = vmatmul.bf16.gmra.mxu0 %v1202
      %v1403 = vpop.f32.mrf.mxu0
      %v1404 = vadd.f32 %v1229, %v1403
      %v1405 = vpop.f32.mrf.mxu0
      %v1406 = vadd.f32 %v1229, %v1405
      %1407 = vmatmul.bf16.gmra.mxu0 %v1203
      %v1408 = vpop.f32.mrf.mxu0
      %v1409 = vadd.f32 %v1229, %v1408
      %v1410 = vpop.f32.mrf.mxu0
      %v1411 = vadd.f32 %v1229, %v1410
      %1412 = vmatmul.bf16.gmra.mxu0 %v1204
      %v1413 = vpop.f32.mrf.mxu0
      %v1414 = vadd.f32 %v1229, %v1413
      %v1415 = vpop.f32.mrf.mxu0
      %v1416 = vadd.f32 %v1229, %v1415
      %1417 = vmatmul.bf16.gmra.mxu0 %v1205
      %v1418 = vpop.f32.mrf.mxu0
      %v1419 = vadd.f32 %v1229, %v1418
      %v1420 = vpop.f32.mrf.mxu0
      %v1421 = vadd.f32 %v1229, %v1420
      %1422 = vmatmul.bf16.gmra.mxu0 %v1206
      %v1423 = vpop.f32.mrf.mxu0
      %v1424 = vadd.f32 %v1229, %v1423
      %v1425 = vpop.f32.mrf.mxu0
      %v1426 = vadd.f32 %v1229, %v1425
      %1427 = vmatmul.bf16.gmra.mxu0 %v1207
      %v1428 = vpop.f32.mrf.mxu0
      %v1429 = vadd.f32 %v1229, %v1428
      %v1430 = vpop.f32.mrf.mxu0
      %v1431 = vadd.f32 %v1229, %v1430
      %1432 = vmatmul.bf16.gmra.mxu0 %v1208
      %v1433 = vpop.f32.mrf.mxu0
      %v1434 = vadd.f32 %v1229, %v1433
      %v1435 = vpop.f32.mrf.mxu0
      %v1436 = vadd.f32 %v1229, %v1435
      %1437 = vmatmul.bf16.gmra.mxu0 %v1209
      %v1438 = vpop.f32.mrf.mxu0
      %v1439 = vadd.f32 %v1229, %v1438
      %v1440 = vpop.f32.mrf.mxu0
      %v1441 = vadd.f32 %v1229, %v1440
      %1442 = vmatmul.bf16.gmra.mxu0 %v1210
      %v1443 = vpop.f32.mrf.mxu0
      %v1444 = vadd.f32 %v1229, %v1443
      %v1445 = vpop.f32.mrf.mxu0
      %v1446 = vadd.f32 %v1229, %v1445
      %1447 = vdwg.mxu0
      %v1448 = vpack.c.bf16 %v1289, %v1289
      %v1449 = vpack.c.bf16 %v1291, %v1291
      %v1450 = vpack.c.bf16 %v1294, %v1294
      %v1451 = vpack.c.bf16 %v1296, %v1296
      %v1452 = vpack.c.bf16 %v1299, %v1299
      %v1453 = vpack.c.bf16 %v1301, %v1301
      %v1454 = vpack.c.bf16 %v1304, %v1304
      %v1455 = vpack.c.bf16 %v1306, %v1306
      %v1456 = vpack.c.bf16 %v1309, %v1309
      %v1457 = vpack.c.bf16 %v1311, %v1311
      %v1458 = vpack.c.bf16 %v1314, %v1314
      %v1459 = vpack.c.bf16 %v1316, %v1316
      %v1460 = vpack.c.bf16 %v1319, %v1319
      %v1461 = vpack.c.bf16 %v1321, %v1321
      %v1462 = vpack.c.bf16 %v1324, %v1324
      %v1463 = vpack.c.bf16 %v1326, %v1326
      %v1464 = vpack.c.bf16 %v1329, %v1329
      %v1465 = vpack.c.bf16 %v1331, %v1331
      %v1466 = vpack.c.bf16 %v1334, %v1334
      %v1467 = vpack.c.bf16 %v1336, %v1336
      %v1468 = vpack.c.bf16 %v1339, %v1339
      %v1469 = vpack.c.bf16 %v1341, %v1341
      %v1470 = vpack.c.bf16 %v1344, %v1344
      %v1471 = vpack.c.bf16 %v1346, %v1346
      %v1472 = vpack.c.bf16 %v1349, %v1349
      %v1473 = vpack.c.bf16 %v1351, %v1351
      %v1474 = vpack.c.bf16 %v1354, %v1354
      %v1475 = vpack.c.bf16 %v1356, %v1356
      %v1476 = vpack.c.bf16 %v1359, %v1359
      %v1477 = vpack.c.bf16 %v1361, %v1361
      %v1478 = vpack.c.bf16 %v1364, %v1364
      %v1479 = vpack.c.bf16 %v1366, %v1366
      %v1480 = vpack.c.bf16 %v1369, %v1369
      %v1481 = vpack.c.bf16 %v1371, %v1371
      %v1482 = vpack.c.bf16 %v1374, %v1374
      %v1483 = vpack.c.bf16 %v1376, %v1376
      %v1484 = vpack.c.bf16 %v1379, %v1379
      %v1485 = vpack.c.bf16 %v1381, %v1381
      %v1486 = vpack.c.bf16 %v1384, %v1384
      %v1487 = vpack.c.bf16 %v1386, %v1386
      %v1488 = vpack.c.bf16 %v1389, %v1389
      %v1489 = vpack.c.bf16 %v1391, %v1391
      %v1490 = vpack.c.bf16 %v1394, %v1394
      %v1491 = vpack.c.bf16 %v1396, %v1396
      %v1492 = vpack.c.bf16 %v1399, %v1399
      %v1493 = vpack.c.bf16 %v1401, %v1401
      %v1494 = vpack.c.bf16 %v1404, %v1404
      %v1495 = vpack.c.bf16 %v1406, %v1406
      %v1496 = vpack.c.bf16 %v1409, %v1409
      %v1497 = vpack.c.bf16 %v1411, %v1411
      %v1498 = vpack.c.bf16 %v1414, %v1414
      %v1499 = vpack.c.bf16 %v1416, %v1416
      %v1500 = vpack.c.bf16 %v1419, %v1419
      %v1501 = vpack.c.bf16 %v1421, %v1421
      %v1502 = vpack.c.bf16 %v1424, %v1424
      %v1503 = vpack.c.bf16 %v1426, %v1426
      %v1504 = vpack.c.bf16 %v1429, %v1429
      %v1505 = vpack.c.bf16 %v1431, %v1431
      %v1506 = vpack.c.bf16 %v1434, %v1434
      %v1507 = vpack.c.bf16 %v1436, %v1436
      %v1508 = vpack.c.bf16 %v1439, %v1439
      %v1509 = vpack.c.bf16 %v1441, %v1441
      %v1510 = vpack.c.bf16 %v1444, %v1444
      %v1511 = vpack.c.bf16 %v1446, %v1446
      %vm1512 = vcmask 76800
      %1513 = vst.msk [vmem:[%s280] sm:$0xf] %vm1512, %v1448
      %1514 = vst.msk [vmem:[%s280 + $0x4] sm:$0xf] %vm1512, %v1449
      %1515 = vst.msk [vmem:[%s280 + $0x8] sm:$0xf] %vm1512, %v1450
      %1516 = vst.msk [vmem:[%s280 + $0xc] sm:$0xf] %vm1512, %v1451
      %1517 = vst.msk [vmem:[%s280 + $0x10] sm:$0xf] %vm1512, %v1452
      %1518 = vst.msk [vmem:[%s280 + $0x14] sm:$0xf] %vm1512, %v1453
      %1519 = vst.msk [vmem:[%s280 + $0x18] sm:$0xf] %vm1512, %v1454
      %1520 = vst.msk [vmem:[%s280 + $0x1c] sm:$0xf] %vm1512, %v1455
      %1521 = vst.msk [vmem:[%s280 + $0x20] sm:$0xf] %vm1512, %v1456
      %1522 = vst.msk [vmem:[%s280 + $0x24] sm:$0xf] %vm1512, %v1457
      %1523 = vst.msk [vmem:[%s280 + $0x28] sm:$0xf] %vm1512, %v1458
      %1524 = vst.msk [vmem:[%s280 + $0x2c] sm:$0xf] %vm1512, %v1459
      %1525 = vst.msk [vmem:[%s280 + $0x30] sm:$0xf] %vm1512, %v1460
      %1526 = vst.msk [vmem:[%s280 + $0x34] sm:$0xf] %vm1512, %v1461
      %1527 = vst.msk [vmem:[%s280 + $0x38] sm:$0xf] %vm1512, %v1462
      %1528 = vst.msk [vmem:[%s280 + $0x3c] sm:$0xf] %vm1512, %v1463
      %1529 = vst.msk [vmem:[%s280 + $0x40] sm:$0xf] %vm1512, %v1464
      %1530 = vst.msk [vmem:[%s280 + $0x44] sm:$0xf] %vm1512, %v1465
      %1531 = vst.msk [vmem:[%s280 + $0x48] sm:$0xf] %vm1512, %v1466
      %1532 = vst.msk [vmem:[%s280 + $0x4c] sm:$0xf] %vm1512, %v1467
      %1533 = vst.msk [vmem:[%s280 + $0x50] sm:$0xf] %vm1512, %v1468
      %1534 = vst.msk [vmem:[%s280 + $0x54] sm:$0xf] %vm1512, %v1469
      %1535 = vst.msk [vmem:[%s280 + $0x58] sm:$0xf] %vm1512, %v1470
      %1536 = vst.msk [vmem:[%s280 + $0x5c] sm:$0xf] %vm1512, %v1471
      %1537 = vst.msk [vmem:[%s280 + $0x60] sm:$0xf] %vm1512, %v1472
      %1538 = vst.msk [vmem:[%s280 + $0x64] sm:$0xf] %vm1512, %v1473
      %1539 = vst.msk [vmem:[%s280 + $0x68] sm:$0xf] %vm1512, %v1474
      %1540 = vst.msk [vmem:[%s280 + $0x6c] sm:$0xf] %vm1512, %v1475
      %1541 = vst.msk [vmem:[%s280 + $0x70] sm:$0xf] %vm1512, %v1476
      %1542 = vst.msk [vmem:[%s280 + $0x74] sm:$0xf] %vm1512, %v1477
      %1543 = vst.msk [vmem:[%s280 + $0x78] sm:$0xf] %vm1512, %v1478
      %1544 = vst.msk [vmem:[%s280 + $0x7c] sm:$0xf] %vm1512, %v1479
      %1545 = vst.msk [vmem:[%s280 + $0x80] sm:$0xf] %vm1512, %v1480
      %1546 = vst.msk [vmem:[%s280 + $0x84] sm:$0xf] %vm1512, %v1481
      %1547 = vst.msk [vmem:[%s280 + $0x88] sm:$0xf] %vm1512, %v1482
      %1548 = vst.msk [vmem:[%s280 + $0x8c] sm:$0xf] %vm1512, %v1483
      %1549 = vst.msk [vmem:[%s280 + $0x90] sm:$0xf] %vm1512, %v1484
      %1550 = vst.msk [vmem:[%s280 + $0x94] sm:$0xf] %vm1512, %v1485
      %1551 = vst.msk [vmem:[%s280 + $0x98] sm:$0xf] %vm1512, %v1486
      %1552 = vst.msk [vmem:[%s280 + $0x9c] sm:$0xf] %vm1512, %v1487
      %1553 = vst.msk [vmem:[%s280 + $0xa0] sm:$0xf] %vm1512, %v1488
      %1554 = vst.msk [vmem:[%s280 + $0xa4] sm:$0xf] %vm1512, %v1489
      %1555 = vst.msk [vmem:[%s280 + $0xa8] sm:$0xf] %vm1512, %v1490
      %1556 = vst.msk [vmem:[%s280 + $0xac] sm:$0xf] %vm1512, %v1491
      %1557 = vst.msk [vmem:[%s280 + $0xb0] sm:$0xf] %vm1512, %v1492
      %1558 = vst.msk [vmem:[%s280 + $0xb4] sm:$0xf] %vm1512, %v1493
      %1559 = vst.msk [vmem:[%s280 + $0xb8] sm:$0xf] %vm1512, %v1494
      %1560 = vst.msk [vmem:[%s280 + $0xbc] sm:$0xf] %vm1512, %v1495
      %1561 = vst.msk [vmem:[%s280 + $0xc0] sm:$0xf] %vm1512, %v1496
      %1562 = vst.msk [vmem:[%s280 + $0xc4] sm:$0xf] %vm1512, %v1497
      %1563 = vst.msk [vmem:[%s280 + $0xc8] sm:$0xf] %vm1512, %v1498
      %1564 = vst.msk [vmem:[%s280 + $0xcc] sm:$0xf] %vm1512, %v1499
      %1565 = vst.msk [vmem:[%s280 + $0xd0] sm:$0xf] %vm1512, %v1500
      %1566 = vst.msk [vmem:[%s280 + $0xd4] sm:$0xf] %vm1512, %v1501
      %1567 = vst.msk [vmem:[%s280 + $0xd8] sm:$0xf] %vm1512, %v1502
      %1568 = vst.msk [vmem:[%s280 + $0xdc] sm:$0xf] %vm1512, %v1503
      %1569 = vst.msk [vmem:[%s280 + $0xe0] sm:$0xf] %vm1512, %v1504
      %1570 = vst.msk [vmem:[%s280 + $0xe4] sm:$0xf] %vm1512, %v1505
      %1571 = vst.msk [vmem:[%s280 + $0xe8] sm:$0xf] %vm1512, %v1506
      %1572 = vst.msk [vmem:[%s280 + $0xec] sm:$0xf] %vm1512, %v1507
      %1573 = vst.msk [vmem:[%s280 + $0xf0] sm:$0xf] %vm1512, %v1508
      %1574 = vst.msk [vmem:[%s280 + $0xf4] sm:$0xf] %vm1512, %v1509
      %1575 = vst.msk [vmem:[%s280 + $0xf8] sm:$0xf] %vm1512, %v1510
      %1576 = vst.msk [vmem:[%s280 + $0xfc] sm:$0xf] %vm1512, %v1511
      %s1577 = smul.u32 64, %s18
      %p1578 = scmp.lt.s32.totalorder %s1577, 127
      %s1579 = scalar_select %p1578, %s1577, 127
      %s1580 = smul.addr %s1579, 4
      %s1581 = scalar_lea.vmem %s7, %s1580
      // Predicated region
      $region49: #{mlp_forward.1} parent=47 // pred_check
        %p1582 = pneg %p188
      $region50: #{mlp_forward.1} parent=47 // pred_check_branch
        %1584 = sbr.rel (%p1582) target = $region52
      $region51: #{mlp_forward.1} parent=47 // pred_region
        %s1585 = smul.u32 64, %s18
      $region52: #{mlp_forward.1} parent=47 // pred_fallthru
        _
    $region48: #{mlp_forward.1} parent=5 // pred_fallthru
      _
    %p1586 = scmp.le.s32.totalorder 2, %s13
    // Predicated region
    $region53: #{mlp_forward.1} parent=5 // pred_check
      %p1587 = pneg %p1586
    $region54: #{mlp_forward.1} parent=5 // pred_check_branch
      %1589 = sbr.rel (%p1587) target = $region56
    $region55: #{mlp_forward.1} parent=5 // pred_region
      %s1590 = ssub.s32 %s13, 2
      // Predicated region
      $region57: #{mlp_forward.1} parent=55 // pred_check
        %p1591 = pneg %p194
      $region58: #{mlp_forward.1} parent=55 // pred_check_branch
        %1593 = sbr.rel (%p1591) target = $region60
      $region59: #{mlp_forward.1} parent=55 // pred_region
        %s1594 = smul.u32 64, %s19
        %p1595 = scmp.lt.s32.totalorder %s1594, 127
        %s1596 = scalar_select %p1595, %s1594, 127
        %s1597 = smul.addr %s1596, 4
        %s1598 = scalar_lea.vmem %s7, %s1597
      $region60: #{mlp_forward.1} parent=55 // pred_fallthru
        _
    $region56: #{mlp_forward.1} parent=5 // pred_fallthru
      _
  $region6: #{mlp_forward.1} parent=0 // loop_footer
    %s17 = sadd.s32 1, %s13
  $region7: #{mlp_forward.1} parent=0 // loop_footer_branch
    %12 = sbr.rel target = $region3
  $region8: #{mlp_forward.1} parent=0 // loop_exit
    _

</llo_original>
